<compile_context>
chip_gen: v6e
topology: v6e:2x2x1
jax: 0.10.0
libtpu: 0.0.40
codegen_flags: <defaults>
</compile_context>

<pallas_src>
import jax
import jax.numpy as jnp
from jax.experimental import pallas as pl
from jax.experimental.pallas import tpu as pltpu


def _layernorm(x, gamma, beta, eps=1e-5):
    # Single pass: one sum + one sum-of-squares reduction (halves XLU traffic
    # vs. mean-then-centered-variance).
    n = x.shape[-1]
    s = jnp.sum(x, axis=-1, keepdims=True)
    ss = jnp.sum(x * x, axis=-1, keepdims=True)
    mu = s * (1.0 / n)
    var = ss * (1.0 / n) - mu * mu
    return (x - mu) * jax.lax.rsqrt(var + eps) * gamma + beta


def _make_kernel(n_heads):
    def kernel(x_ref, bias_ref,
               wqkv_ref, bqkv_ref, wo_ref, bo_ref,
               ln1_g_ref, ln1_b_ref,
               w1_ref, b1_ref, w2_ref, b2_ref,
               ln2_g_ref, ln2_b_ref,
               o_ref, ctx_ref):
        M, E = x_ref.shape                     # M = block_b * T rows
        Bb = bias_ref.shape[0]
        T = bias_ref.shape[2]
        H = n_heads
        Dh = E // H

        x2d = x_ref[...]                       # (M, E) f32 (kept f32 for residual/LN)
        x_bf = x2d.astype(jnp.bfloat16)

        # --- fused QKV projection: one big-M, wide-N MXU matmul ---
        qkv = jnp.dot(x_bf, wqkv_ref[...],
                      preferred_element_type=jnp.float32) + bqkv_ref[...]
        # 1/sqrt(Dh) is folded into the Q columns of wqkv/bqkv in the wrapper.
        q3 = qkv[:, :E].reshape(Bb, T, E).astype(jnp.bfloat16)
        k3 = qkv[:, E:2 * E].reshape(Bb, T, E).astype(jnp.bfloat16)
        v3 = qkv[:, 2 * E:].reshape(Bb, T, E).astype(jnp.bfloat16)

        bias = bias_ref[...]                   # (Bb, 1, T) additive key-padding bias

        # --- attention: all sequences of the block batched per head; contexts
        #     concatenated into VMEM scratch, Wo applied once after the loop ---
        for h in range(H):
            sl = slice(h * Dh, (h + 1) * Dh)
            s = jnp.einsum("bqd,bkd->bqk", q3[:, :, sl], k3[:, :, sl],
                           preferred_element_type=jnp.float32)   # (Bb,T,T) f32
            s = s + bias
            m = jnp.max(s, axis=-1, keepdims=True)
            p = jnp.exp(s - m)
            l = jnp.sum(p, axis=-1, keepdims=True)
            p = p * (1.0 / l)                  # exact normalization (tiny tensor)
            ctx = jnp.einsum("bqk,bkd->bqd", p.astype(jnp.bfloat16), v3[:, :, sl],
                             preferred_element_type=jnp.float32)  # (Bb,T,Dh)
            ctx_ref[:, :, sl] = ctx            # concat into scratch at lane offset
        # TODO(synk): for large T, replace the materialized (Bb,T,T) scores with
        # flash-style KV tiling + online softmax.

        attn = jnp.dot(ctx_ref[...].reshape(M, E).astype(jnp.bfloat16), wo_ref[...],
                       preferred_element_type=jnp.float32) + bo_ref[...]

        # residual + layernorm (dropout == identity, eval mode)
        x1 = _layernorm(x2d + attn, ln1_g_ref[...], ln1_b_ref[...])

        # --- feed forward (bf16 operands, f32 accumulation) ---
        h1 = jnp.dot(x1.astype(jnp.bfloat16), w1_ref[...],
                     preferred_element_type=jnp.float32) + b1_ref[...]
        h1 = jnp.maximum(h1, 0.0)
        h2 = jnp.dot(h1.astype(jnp.bfloat16), w2_ref[...],
                     preferred_element_type=jnp.float32) + b2_ref[...]

        o_ref[...] = _layernorm(x1 + h2, ln2_g_ref[...], ln2_b_ref[...])

    return kernel


def _pick_block_b(B, T, max_rows=1024):
    """Largest divisor of B (capped at B//2 so the parallel grid axis has >= 2
    steps for v7x's 2 TensorCores) keeping block_b*T within a comfortable
    MXU/VMEM tile."""
    cap = max(1, B // 2)
    best = 1
    for d in range(1, cap + 1):
        if B % d == 0 and d * T <= max_rows:
            best = d
    # TODO(synk): when T > max_rows, tile the sequence axis (flash-style) instead
    # of silently running M = T rows per step.
    return best


def transformer_encoder_layer(x, pad_mask, params, n_heads, block_b=None):
    """x: (B, T, E) f32; pad_mask: (B, T) bool (True = padding key)."""
    B, T, E = x.shape
    HID = params["w1"].shape[1]
    Dh = E // n_heads
    if block_b is None:
        block_b = _pick_block_b(B, T)
    assert B % block_b == 0

    # Additive key-padding bias (0 at valid keys, -1e30 at padded keys), (B,1,T).
    bias = jnp.where(pad_mask, -1e30, 0.0).astype(jnp.float32).reshape(B, 1, T)

    def row(v):          # 1-D param -> (1, D) so it broadcasts cleanly in VMEM
        return v.reshape(1, -1)

    bf16 = jnp.bfloat16
    scale = Dh ** -0.5
    # Fused QKV weight/bias; 1/sqrt(Dh) folded into the Q block so the kernel
    # does no extra (M, E) scaling pass.
    wqkv = jnp.concatenate(
        [params["wq"] * scale, params["wk"], params["wv"]], axis=1).astype(bf16)
    bqkv = jnp.concatenate(
        [params["bq"] * scale, params["bk"], params["bv"]]).reshape(1, -1)

    # x / out as a 2-D (B*T, E) slab: the kernel sees M = block_b*T rows directly
    # (lane-dense for production E that are multiples of 128).
    x2 = x.reshape(B * T, E)

    args = (
        x2, bias,
        wqkv, bqkv,
        params["wo"].astype(bf16), row(params["bo"]),
        row(params["ln1_g"]), row(params["ln1_b"]),
        params["w1"].astype(bf16), row(params["b1"]),
        params["w2"].astype(bf16), row(params["b2"]),
        row(params["ln2_g"]), row(params["ln2_b"]),
    )

    # Weights/biases/LN params: whole-array VMEM residency (constant across the
    # grid) -> no per-step DMA and no double buffering for these operands.
    resident = pl.BlockSpec(memory_space=pltpu.MemorySpace.VMEM)

    in_specs = [
        pl.BlockSpec((block_b * T, E), lambda b: (b, 0)),     # x slab
        pl.BlockSpec((block_b, 1, T), lambda b: (b, 0, 0)),   # additive mask bias
    ] + [resident] * (len(args) - 2)
    out_specs = pl.BlockSpec((block_b * T, E), lambda b: (b, 0))

    weight_bytes = 2 * (4 * E * E + 2 * E * HID) + 4 * (6 * E + HID + 3 * E)
    cost = pl.CostEstimate(
        flops=2 * B * T * (4 * E * E + 2 * E * HID) + 4 * B * n_heads * T * T * Dh,
        transcendentals=B * n_heads * T * T,
        bytes_accessed=4 * (2 * B * T * E + B * T) + weight_bytes,
    )

    out2 = pl.pallas_call(
        _make_kernel(n_heads),
        out_shape=jax.ShapeDtypeStruct((B * T, E), jnp.float32),
        grid=(B // block_b,),
        in_specs=in_specs,
        out_specs=out_specs,
        scratch_shapes=[pltpu.VMEM((block_b, T, E), jnp.float32)],  # ctx concat
        compiler_params=pltpu.CompilerParams(
            dimension_semantics=("parallel",),
            # 48 MiB: safe on v7x (64 MiB physical); v5e/v6e (128 MiB) could go higher.
            vmem_limit_bytes=48 * 1024 * 1024,
        ),
        cost_estimate=cost,
    )(*args)
    return out2.reshape(B, T, E)


def reference(x, pad_mask, params, n_heads):
    """Pure-JAX f32 reference mirroring the PyTorch forward (eval mode)."""
    B, T, E = x.shape
    Dh = E // n_heads
    scale = Dh ** -0.5

    q = x @ params["wq"] + params["bq"]
    k = x @ params["wk"] + params["bk"]
    v = x @ params["wv"] + params["bv"]
    q = q * scale

    def split(t):  # (B,T,E) -> (B,H,T,Dh)
        return t.reshape(B, T, n_heads, Dh).transpose(0, 2, 1, 3)

    qh, kh, vh = split(q), split(k), split(v)
    s = jnp.einsum("bhtd,bhsd->bhts", qh, kh)
    s = jnp.where(pad_mask[:, None, None, :], -1e30, s)
    p = jax.nn.softmax(s, axis=-1)
    attn = jnp.einsum("bhts,bhsd->bhtd", p, vh).transpose(0, 2, 1, 3).reshape(B, T, E)
    attn = attn @ params["wo"] + params["bo"]

    x1 = _layernorm(x + attn, params["ln1_g"], params["ln1_b"])
    h = jax.nn.relu(x1 @ params["w1"] + params["b1"])
    h = h @ params["w2"] + params["b2"]
    return _layernorm(x1 + h, params["ln2_g"], params["ln2_b"])


def init_params(key, embed_dim, hidden_dim):
    ks = jax.random.split(key, 6)
    std = 0.02
    return {
        "wq": jax.random.normal(ks[0], (embed_dim, embed_dim), jnp.float32) * std,
        "wk": jax.random.normal(ks[1], (embed_dim, embed_dim), jnp.float32) * std,
        "wv": jax.random.normal(ks[2], (embed_dim, embed_dim), jnp.float32) * std,
        "wo": jax.random.normal(ks[3], (embed_dim, embed_dim), jnp.float32) * std,
        "bq": jnp.zeros((embed_dim,), jnp.float32),
        "bk": jnp.zeros((embed_dim,), jnp.float32),
        "bv": jnp.zeros((embed_dim,), jnp.float32),
        "bo": jnp.zeros((embed_dim,), jnp.float32),
        "ln1_g": jnp.ones((embed_dim,), jnp.float32),
        "ln1_b": jnp.zeros((embed_dim,), jnp.float32),
        "w1": jax.random.normal(ks[4], (embed_dim, hidden_dim), jnp.float32) * std,
        "b1": jnp.zeros((hidden_dim,), jnp.float32),
        "w2": jax.random.normal(ks[5], (hidden_dim, embed_dim), jnp.float32) * std,
        "b2": jnp.zeros((embed_dim,), jnp.float32),
        "ln2_g": jnp.ones((embed_dim,), jnp.float32),
        "ln2_b": jnp.zeros((embed_dim,), jnp.float32),
    }


if __name__ == "__main__":
    # Small config consistent with the module: embed_dim=32, hidden_dim=64,
    # n_heads=4, batch=2, seq=8.
    B, T, E, HID, HEADS = 2, 8, 32, 64, 4

    key = jax.random.PRNGKey(0)
    kx, kp = jax.random.split(key)
    x = jax.random.normal(kx, (B, T, E), jnp.float32)
    # pad the last two positions of batch element 1
    pad_mask = jnp.zeros((B, T), jnp.bool_).at[1, -2:].set(True)

    params = init_params(kp, E, HID)

    out = transformer_encoder_layer(x, pad_mask, params, HEADS)
    out = jax.block_until_ready(out)

    ref = reference(x, pad_mask, params, HEADS)
    assert out.shape == (B, T, E)
    err = float(jnp.max(jnp.abs(out - ref)))
    # Tolerance accommodates bf16 matmul operands (f32 accumulation / softmax / LN).
    assert jnp.allclose(out, ref, atol=2e-2, rtol=2e-2), err
    print("KERNEL_OK")
</pallas_src>

<mosaic_0001>
module attributes {stable_mosaic.version = 11 : i64} {
  func.func @kernel(%arg0: i32, %arg1: memref<8x32xf32, #tpu.memory_space<vmem>>, %arg2: memref<1x1x8xf32, #tpu.memory_space<vmem>>, %arg3: memref<32x96xbf16, #tpu.memory_space<vmem>>, %arg4: memref<1x96xf32, #tpu.memory_space<vmem>>, %arg5: memref<32x32xbf16, #tpu.memory_space<vmem>>, %arg6: memref<1x32xf32, #tpu.memory_space<vmem>>, %arg7: memref<1x32xf32, #tpu.memory_space<vmem>>, %arg8: memref<1x32xf32, #tpu.memory_space<vmem>>, %arg9: memref<32x64xbf16, #tpu.memory_space<vmem>>, %arg10: memref<1x64xf32, #tpu.memory_space<vmem>>, %arg11: memref<64x32xbf16, #tpu.memory_space<vmem>>, %arg12: memref<1x32xf32, #tpu.memory_space<vmem>>, %arg13: memref<1x32xf32, #tpu.memory_space<vmem>>, %arg14: memref<1x32xf32, #tpu.memory_space<vmem>>, %arg15: memref<8x32xf32, #tpu.memory_space<vmem>>, %arg16: memref<1x8x32xf32, #tpu.memory_space<vmem>>) attributes {dimension_semantics = [#tpu.dimension_semantics<parallel>], iteration_bounds = array<i64: 2>, scalar_prefetch = 0 : i64, scratch_operands = 1 : i64, tpu.core_type = #tpu.core_type<tc>, window_params = [{transform_indices = @transform_0, window_bounds = array<i64: 8, 32>}, {transform_indices = @transform_1, window_bounds = array<i64: 1, 1, 8>}, {pipeline_mode = #tpu.pipeline_mode<synchronous>, transform_indices = @transform_2, window_bounds = array<i64: 32, 96>}, {pipeline_mode = #tpu.pipeline_mode<synchronous>, transform_indices = @transform_3, window_bounds = array<i64: 1, 96>}, {pipeline_mode = #tpu.pipeline_mode<synchronous>, transform_indices = @transform_4, window_bounds = array<i64: 32, 32>}, {pipeline_mode = #tpu.pipeline_mode<synchronous>, transform_indices = @transform_5, window_bounds = array<i64: 1, 32>}, {pipeline_mode = #tpu.pipeline_mode<synchronous>, transform_indices = @transform_6, window_bounds = array<i64: 1, 32>}, {pipeline_mode = #tpu.pipeline_mode<synchronous>, transform_indices = @transform_7, window_bounds = array<i64: 1, 32>}, {pipeline_mode = #tpu.pipeline_mode<synchronous>, transform_indices = @transform_8, window_bounds = array<i64: 32, 64>}, {pipeline_mode = #tpu.pipeline_mode<synchronous>, transform_indices = @transform_9, window_bounds = array<i64: 1, 64>}, {pipeline_mode = #tpu.pipeline_mode<synchronous>, transform_indices = @transform_10, window_bounds = array<i64: 64, 32>}, {pipeline_mode = #tpu.pipeline_mode<synchronous>, transform_indices = @transform_11, window_bounds = array<i64: 1, 32>}, {pipeline_mode = #tpu.pipeline_mode<synchronous>, transform_indices = @transform_12, window_bounds = array<i64: 1, 32>}, {pipeline_mode = #tpu.pipeline_mode<synchronous>, transform_indices = @transform_13, window_bounds = array<i64: 1, 32>}, {transform_indices = @transform_14, window_bounds = array<i64: 8, 32>}]} {
    %c0 = arith.constant 0 : index
    %c0_0 = arith.constant 0 : index
    %0 = vector.load %arg1[%c0, %c0_0] : memref<8x32xf32, #tpu.memory_space<vmem>>, vector<8x32xf32>
    %1 = arith.truncf %0 : vector<8x32xf32> to vector<8x32xbf16>
    %c0_1 = arith.constant 0 : index
    %c0_2 = arith.constant 0 : index
    %2 = vector.load %arg3[%c0_1, %c0_2] : memref<32x96xbf16, #tpu.memory_space<vmem>>, vector<32x96xbf16>
    %cst = arith.constant dense<0.000000e+00> : vector<8x96xf32>
    %3 = tpu.matmul %1, %2, %cst {dimension_numbers = #tpu.dot_dimension_numbers<[1], [0], [0], [1], [0, 0, 1, 1], [], []>} : vector<8x32xbf16>, vector<32x96xbf16>, vector<8x96xf32> -> vector<8x96xf32>
    %c0_3 = arith.constant 0 : index
    %c0_4 = arith.constant 0 : index
    %4 = vector.load %arg4[%c0_3, %c0_4] : memref<1x96xf32, #tpu.memory_space<vmem>>, vector<1x96xf32>
    %5 = vector.broadcast %4 : vector<1x96xf32> to vector<8x96xf32>
    %6 = arith.addf %3, %5 : vector<8x96xf32>
    %7 = vector.extract_strided_slice %6 {offsets = [0, 0], sizes = [8, 32], strides = [1, 1]} : vector<8x96xf32> to vector<8x32xf32>
    %8 = vector.shape_cast %7 : vector<8x32xf32> to vector<1x8x32xf32>
    %9 = arith.truncf %8 : vector<1x8x32xf32> to vector<1x8x32xbf16>
    %10 = vector.extract_strided_slice %6 {offsets = [0, 32], sizes = [8, 32], strides = [1, 1]} : vector<8x96xf32> to vector<8x32xf32>
    %11 = vector.shape_cast %10 : vector<8x32xf32> to vector<1x8x32xf32>
    %12 = arith.truncf %11 : vector<1x8x32xf32> to vector<1x8x32xbf16>
    %13 = vector.extract_strided_slice %6 {offsets = [0, 64], sizes = [8, 32], strides = [1, 1]} : vector<8x96xf32> to vector<8x32xf32>
    %14 = vector.shape_cast %13 : vector<8x32xf32> to vector<1x8x32xf32>
    %15 = arith.truncf %14 : vector<1x8x32xf32> to vector<1x8x32xbf16>
    %c0_5 = arith.constant 0 : index
    %c0_6 = arith.constant 0 : index
    %c0_7 = arith.constant 0 : index
    %16 = vector.load %arg2[%c0_5, %c0_6, %c0_7] : memref<1x1x8xf32, #tpu.memory_space<vmem>>, vector<1x1x8xf32>
    %17 = vector.extract_strided_slice %9 {offsets = [0, 0, 0], sizes = [1, 8, 8], strides = [1, 1, 1]} : vector<1x8x32xbf16> to vector<1x8x8xbf16>
    %18 = vector.extract_strided_slice %12 {offsets = [0, 0, 0], sizes = [1, 8, 8], strides = [1, 1, 1]} : vector<1x8x32xbf16> to vector<1x8x8xbf16>
    "tpu.trace_start"() <{level = 10 : i32, message = "bqd,bkd->bqk"}> : () -> ()
    %cst_8 = arith.constant dense<0.000000e+00> : vector<1x8x8xf32>
    %19 = tpu.matmul %17, %18, %cst_8 {dimension_numbers = #tpu.dot_dimension_numbers<[2], [2], [1], [1], [0, 0, 0, 1, 1, 1], [0], [0]>} : vector<1x8x8xbf16>, vector<1x8x8xbf16>, vector<1x8x8xf32> -> vector<1x8x8xf32>
    "tpu.trace_stop"() : () -> ()
    %20 = vector.broadcast %16 : vector<1x1x8xf32> to vector<1x8x8xf32>
    %21 = arith.addf %19, %20 : vector<1x8x8xf32>
    %cst_9 = arith.constant dense<0xFF800000> : vector<1x8xf32>
    %22 = vector.multi_reduction <maximumf>, %21, %cst_9 [2] : vector<1x8x8xf32> to vector<1x8xf32>
    %23 = vector.shape_cast %22 : vector<1x8xf32> to vector<1x8x1xf32>
    %24 = vector.broadcast %23 : vector<1x8x1xf32> to vector<1x8x8xf32>
    %25 = arith.subf %21, %24 : vector<1x8x8xf32>
    %26 = math.exp %25 : vector<1x8x8xf32>
    %cst_10 = arith.constant dense<0.000000e+00> : vector<1x8xf32>
    %27 = vector.multi_reduction <add>, %26, %cst_10 [2] : vector<1x8x8xf32> to vector<1x8xf32>
    %28 = vector.shape_cast %27 : vector<1x8xf32> to vector<1x8x1xf32>
    %cst_11 = arith.constant 1.000000e+00 : f32
    %29 = vector.broadcast %cst_11 : f32 to vector<1x8x1xf32>
    %30 = arith.divf %29, %28 : vector<1x8x1xf32>
    %31 = vector.broadcast %30 : vector<1x8x1xf32> to vector<1x8x8xf32>
    %32 = arith.mulf %26, %31 : vector<1x8x8xf32>
    %33 = arith.truncf %32 : vector<1x8x8xf32> to vector<1x8x8xbf16>
    %34 = vector.extract_strided_slice %15 {offsets = [0, 0, 0], sizes = [1, 8, 8], strides = [1, 1, 1]} : vector<1x8x32xbf16> to vector<1x8x8xbf16>
    "tpu.trace_start"() <{level = 10 : i32, message = "bqk,bkd->bqd"}> : () -> ()
    %cst_12 = arith.constant dense<0.000000e+00> : vector<1x8x8xf32>
    %35 = tpu.matmul %33, %34, %cst_12 {dimension_numbers = #tpu.dot_dimension_numbers<[2], [1], [1], [2], [0, 0, 0, 1, 1, 2], [0], [0]>} : vector<1x8x8xbf16>, vector<1x8x8xbf16>, vector<1x8x8xf32> -> vector<1x8x8xf32>
    "tpu.trace_stop"() : () -> ()
    %c0_13 = arith.constant 0 : index
    %c0_14 = arith.constant 0 : index
    %c0_15 = arith.constant 0 : index
    %36 = vector.load %arg16[%c0_13, %c0_14, %c0_15] : memref<1x8x32xf32, #tpu.memory_space<vmem>>, vector<1x8x8xf32>
    tpu.vector_store %arg16[%c0_13, %c0_14, %c0_15], %35 {strides = array<i32>} : memref<1x8x32xf32, #tpu.memory_space<vmem>>, vector<1x8x8xf32>,
    %37 = vector.extract_strided_slice %9 {offsets = [0, 0, 8], sizes = [1, 8, 8], strides = [1, 1, 1]} : vector<1x8x32xbf16> to vector<1x8x8xbf16>
    %38 = vector.extract_strided_slice %12 {offsets = [0, 0, 8], sizes = [1, 8, 8], strides = [1, 1, 1]} : vector<1x8x32xbf16> to vector<1x8x8xbf16>
    "tpu.trace_start"() <{level = 10 : i32, message = "bqd,bkd->bqk"}> : () -> ()
    %cst_16 = arith.constant dense<0.000000e+00> : vector<1x8x8xf32>
    %39 = tpu.matmul %37, %38, %cst_16 {dimension_numbers = #tpu.dot_dimension_numbers<[2], [2], [1], [1], [0, 0, 0, 1, 1, 1], [0], [0]>} : vector<1x8x8xbf16>, vector<1x8x8xbf16>, vector<1x8x8xf32> -> vector<1x8x8xf32>
    "tpu.trace_stop"() : () -> ()
    %40 = vector.broadcast %16 : vector<1x1x8xf32> to vector<1x8x8xf32>
    %41 = arith.addf %39, %40 : vector<1x8x8xf32>
    %cst_17 = arith.constant dense<0xFF800000> : vector<1x8xf32>
    %42 = vector.multi_reduction <maximumf>, %41, %cst_17 [2] : vector<1x8x8xf32> to vector<1x8xf32>
    %43 = vector.shape_cast %42 : vector<1x8xf32> to vector<1x8x1xf32>
    %44 = vector.broadcast %43 : vector<1x8x1xf32> to vector<1x8x8xf32>
    %45 = arith.subf %41, %44 : vector<1x8x8xf32>
    %46 = math.exp %45 : vector<1x8x8xf32>
    %cst_18 = arith.constant dense<0.000000e+00> : vector<1x8xf32>
    %47 = vector.multi_reduction <add>, %46, %cst_18 [2] : vector<1x8x8xf32> to vector<1x8xf32>
    %48 = vector.shape_cast %47 : vector<1x8xf32> to vector<1x8x1xf32>
    %cst_19 = arith.constant 1.000000e+00 : f32
    %49 = vector.broadcast %cst_19 : f32 to vector<1x8x1xf32>
    %50 = arith.divf %49, %48 : vector<1x8x1xf32>
    %51 = vector.broadcast %50 : vector<1x8x1xf32> to vector<1x8x8xf32>
    %52 = arith.mulf %46, %51 : vector<1x8x8xf32>
    %53 = arith.truncf %52 : vector<1x8x8xf32> to vector<1x8x8xbf16>
    %54 = vector.extract_strided_slice %15 {offsets = [0, 0, 8], sizes = [1, 8, 8], strides = [1, 1, 1]} : vector<1x8x32xbf16> to vector<1x8x8xbf16>
    "tpu.trace_start"() <{level = 10 : i32, message = "bqk,bkd->bqd"}> : () -> ()
    %cst_20 = arith.constant dense<0.000000e+00> : vector<1x8x8xf32>
    %55 = tpu.matmul %53, %54, %cst_20 {dimension_numbers = #tpu.dot_dimension_numbers<[2], [1], [1], [2], [0, 0, 0, 1, 1, 2], [0], [0]>} : vector<1x8x8xbf16>, vector<1x8x8xbf16>, vector<1x8x8xf32> -> vector<1x8x8xf32>
    "tpu.trace_stop"() : () -> ()
    %c0_21 = arith.constant 0 : index
    %c0_22 = arith.constant 0 : index
    %c8 = arith.constant 8 : index
    %56 = vector.load %arg16[%c0_21, %c0_22, %c8] : memref<1x8x32xf32, #tpu.memory_space<vmem>>, vector<1x8x8xf32>
    tpu.vector_store %arg16[%c0_21, %c0_22, %c8], %55 {strides = array<i32>} : memref<1x8x32xf32, #tpu.memory_space<vmem>>, vector<1x8x8xf32>,
    %57 = vector.extract_strided_slice %9 {offsets = [0, 0, 16], sizes = [1, 8, 8], strides = [1, 1, 1]} : vector<1x8x32xbf16> to vector<1x8x8xbf16>
    %58 = vector.extract_strided_slice %12 {offsets = [0, 0, 16], sizes = [1, 8, 8], strides = [1, 1, 1]} : vector<1x8x32xbf16> to vector<1x8x8xbf16>
    "tpu.trace_start"() <{level = 10 : i32, message = "bqd,bkd->bqk"}> : () -> ()
    %cst_23 = arith.constant dense<0.000000e+00> : vector<1x8x8xf32>
    %59 = tpu.matmul %57, %58, %cst_23 {dimension_numbers = #tpu.dot_dimension_numbers<[2], [2], [1], [1], [0, 0, 0, 1, 1, 1], [0], [0]>} : vector<1x8x8xbf16>, vector<1x8x8xbf16>, vector<1x8x8xf32> -> vector<1x8x8xf32>
    "tpu.trace_stop"() : () -> ()
    %60 = vector.broadcast %16 : vector<1x1x8xf32> to vector<1x8x8xf32>
    %61 = arith.addf %59, %60 : vector<1x8x8xf32>
    %cst_24 = arith.constant dense<0xFF800000> : vector<1x8xf32>
    %62 = vector.multi_reduction <maximumf>, %61, %cst_24 [2] : vector<1x8x8xf32> to vector<1x8xf32>
    %63 = vector.shape_cast %62 : vector<1x8xf32> to vector<1x8x1xf32>
    %64 = vector.broadcast %63 : vector<1x8x1xf32> to vector<1x8x8xf32>
    %65 = arith.subf %61, %64 : vector<1x8x8xf32>
    %66 = math.exp %65 : vector<1x8x8xf32>
    %cst_25 = arith.constant dense<0.000000e+00> : vector<1x8xf32>
    %67 = vector.multi_reduction <add>, %66, %cst_25 [2] : vector<1x8x8xf32> to vector<1x8xf32>
    %68 = vector.shape_cast %67 : vector<1x8xf32> to vector<1x8x1xf32>
    %cst_26 = arith.constant 1.000000e+00 : f32
    %69 = vector.broadcast %cst_26 : f32 to vector<1x8x1xf32>
    %70 = arith.divf %69, %68 : vector<1x8x1xf32>
    %71 = vector.broadcast %70 : vector<1x8x1xf32> to vector<1x8x8xf32>
    %72 = arith.mulf %66, %71 : vector<1x8x8xf32>
    %73 = arith.truncf %72 : vector<1x8x8xf32> to vector<1x8x8xbf16>
    %74 = vector.extract_strided_slice %15 {offsets = [0, 0, 16], sizes = [1, 8, 8], strides = [1, 1, 1]} : vector<1x8x32xbf16> to vector<1x8x8xbf16>
    "tpu.trace_start"() <{level = 10 : i32, message = "bqk,bkd->bqd"}> : () -> ()
    %cst_27 = arith.constant dense<0.000000e+00> : vector<1x8x8xf32>
    %75 = tpu.matmul %73, %74, %cst_27 {dimension_numbers = #tpu.dot_dimension_numbers<[2], [1], [1], [2], [0, 0, 0, 1, 1, 2], [0], [0]>} : vector<1x8x8xbf16>, vector<1x8x8xbf16>, vector<1x8x8xf32> -> vector<1x8x8xf32>
    "tpu.trace_stop"() : () -> ()
    %c0_28 = arith.constant 0 : index
    %c0_29 = arith.constant 0 : index
    %c16 = arith.constant 16 : index
    %76 = vector.load %arg16[%c0_28, %c0_29, %c16] : memref<1x8x32xf32, #tpu.memory_space<vmem>>, vector<1x8x8xf32>
    tpu.vector_store %arg16[%c0_28, %c0_29, %c16], %75 {strides = array<i32>} : memref<1x8x32xf32, #tpu.memory_space<vmem>>, vector<1x8x8xf32>,
    %77 = vector.extract_strided_slice %9 {offsets = [0, 0, 24], sizes = [1, 8, 8], strides = [1, 1, 1]} : vector<1x8x32xbf16> to vector<1x8x8xbf16>
    %78 = vector.extract_strided_slice %12 {offsets = [0, 0, 24], sizes = [1, 8, 8], strides = [1, 1, 1]} : vector<1x8x32xbf16> to vector<1x8x8xbf16>
    "tpu.trace_start"() <{level = 10 : i32, message = "bqd,bkd->bqk"}> : () -> ()
    %cst_30 = arith.constant dense<0.000000e+00> : vector<1x8x8xf32>
    %79 = tpu.matmul %77, %78, %cst_30 {dimension_numbers = #tpu.dot_dimension_numbers<[2], [2], [1], [1], [0, 0, 0, 1, 1, 1], [0], [0]>} : vector<1x8x8xbf16>, vector<1x8x8xbf16>, vector<1x8x8xf32> -> vector<1x8x8xf32>
    "tpu.trace_stop"() : () -> ()
    %80 = vector.broadcast %16 : vector<1x1x8xf32> to vector<1x8x8xf32>
    %81 = arith.addf %79, %80 : vector<1x8x8xf32>
    %cst_31 = arith.constant dense<0xFF800000> : vector<1x8xf32>
    %82 = vector.multi_reduction <maximumf>, %81, %cst_31 [2] : vector<1x8x8xf32> to vector<1x8xf32>
    %83 = vector.shape_cast %82 : vector<1x8xf32> to vector<1x8x1xf32>
    %84 = vector.broadcast %83 : vector<1x8x1xf32> to vector<1x8x8xf32>
    %85 = arith.subf %81, %84 : vector<1x8x8xf32>
    %86 = math.exp %85 : vector<1x8x8xf32>
    %cst_32 = arith.constant dense<0.000000e+00> : vector<1x8xf32>
    %87 = vector.multi_reduction <add>, %86, %cst_32 [2] : vector<1x8x8xf32> to vector<1x8xf32>
    %88 = vector.shape_cast %87 : vector<1x8xf32> to vector<1x8x1xf32>
    %cst_33 = arith.constant 1.000000e+00 : f32
    %89 = vector.broadcast %cst_33 : f32 to vector<1x8x1xf32>
    %90 = arith.divf %89, %88 : vector<1x8x1xf32>
    %91 = vector.broadcast %90 : vector<1x8x1xf32> to vector<1x8x8xf32>
    %92 = arith.mulf %86, %91 : vector<1x8x8xf32>
    %93 = arith.truncf %92 : vector<1x8x8xf32> to vector<1x8x8xbf16>
    %94 = vector.extract_strided_slice %15 {offsets = [0, 0, 24], sizes = [1, 8, 8], strides = [1, 1, 1]} : vector<1x8x32xbf16> to vector<1x8x8xbf16>
    "tpu.trace_start"() <{level = 10 : i32, message = "bqk,bkd->bqd"}> : () -> ()
    %cst_34 = arith.constant dense<0.000000e+00> : vector<1x8x8xf32>
    %95 = tpu.matmul %93, %94, %cst_34 {dimension_numbers = #tpu.dot_dimension_numbers<[2], [1], [1], [2], [0, 0, 0, 1, 1, 2], [0], [0]>} : vector<1x8x8xbf16>, vector<1x8x8xbf16>, vector<1x8x8xf32> -> vector<1x8x8xf32>
    "tpu.trace_stop"() : () -> ()
    %c0_35 = arith.constant 0 : index
    %c0_36 = arith.constant 0 : index
    %c24 = arith.constant 24 : index
    %96 = vector.load %arg16[%c0_35, %c0_36, %c24] : memref<1x8x32xf32, #tpu.memory_space<vmem>>, vector<1x8x8xf32>
    tpu.vector_store %arg16[%c0_35, %c0_36, %c24], %95 {strides = array<i32>} : memref<1x8x32xf32, #tpu.memory_space<vmem>>, vector<1x8x8xf32>,
    %c0_37 = arith.constant 0 : index
    %c0_38 = arith.constant 0 : index
    %c0_39 = arith.constant 0 : index
    %97 = vector.load %arg16[%c0_37, %c0_38, %c0_39] : memref<1x8x32xf32, #tpu.memory_space<vmem>>, vector<1x8x32xf32>
    %98 = vector.shape_cast %97 : vector<1x8x32xf32> to vector<8x32xf32>
    %99 = arith.truncf %98 : vector<8x32xf32> to vector<8x32xbf16>
    %c0_40 = arith.constant 0 : index
    %c0_41 = arith.constant 0 : index
    %100 = vector.load %arg5[%c0_40, %c0_41] : memref<32x32xbf16, #tpu.memory_space<vmem>>, vector<32x32xbf16>
    %cst_42 = arith.constant dense<0.000000e+00> : vector<8x32xf32>
    %101 = tpu.matmul %99, %100, %cst_42 {dimension_numbers = #tpu.dot_dimension_numbers<[1], [0], [0], [1], [0, 0, 1, 1], [], []>} : vector<8x32xbf16>, vector<32x32xbf16>, vector<8x32xf32> -> vector<8x32xf32>
    %c0_43 = arith.constant 0 : index
    %c0_44 = arith.constant 0 : index
    %102 = vector.load %arg6[%c0_43, %c0_44] : memref<1x32xf32, #tpu.memory_space<vmem>>, vector<1x32xf32>
    %103 = vector.broadcast %102 : vector<1x32xf32> to vector<8x32xf32>
    %104 = arith.addf %101, %103 : vector<8x32xf32>
    %105 = arith.addf %0, %104 : vector<8x32xf32>
    %c0_45 = arith.constant 0 : index
    %c0_46 = arith.constant 0 : index
    %106 = vector.load %arg7[%c0_45, %c0_46] : memref<1x32xf32, #tpu.memory_space<vmem>>, vector<1x32xf32>
    %c0_47 = arith.constant 0 : index
    %c0_48 = arith.constant 0 : index
    %107 = vector.load %arg8[%c0_47, %c0_48] : memref<1x32xf32, #tpu.memory_space<vmem>>, vector<1x32xf32>
    %cst_49 = arith.constant dense<0.000000e+00> : vector<8xf32>
    %108 = vector.multi_reduction <add>, %105, %cst_49 [1] : vector<8x32xf32> to vector<8xf32>
    %109 = vector.shape_cast %108 : vector<8xf32> to vector<8x1xf32>
    %110 = arith.mulf %105, %105 : vector<8x32xf32>
    %cst_50 = arith.constant dense<0.000000e+00> : vector<8xf32>
    %111 = vector.multi_reduction <add>, %110, %cst_50 [1] : vector<8x32xf32> to vector<8xf32>
    %112 = vector.shape_cast %111 : vector<8xf32> to vector<8x1xf32>
    %cst_51 = arith.constant 3.125000e-02 : f32
    %113 = vector.broadcast %cst_51 : f32 to vector<8x1xf32>
    %114 = arith.mulf %109, %113 : vector<8x1xf32>
    %cst_52 = arith.constant 3.125000e-02 : f32
    %115 = vector.broadcast %cst_52 : f32 to vector<8x1xf32>
    %116 = arith.mulf %112, %115 : vector<8x1xf32>
    %117 = arith.mulf %114, %114 : vector<8x1xf32>
    %118 = arith.subf %116, %117 : vector<8x1xf32>
    %119 = vector.broadcast %114 : vector<8x1xf32> to vector<8x32xf32>
    %120 = arith.subf %105, %119 : vector<8x32xf32>
    %cst_53 = arith.constant 9.99999974E-6 : f32
    %121 = vector.broadcast %cst_53 : f32 to vector<8x1xf32>
    %122 = arith.addf %118, %121 : vector<8x1xf32>
    %123 = math.rsqrt %122 : vector<8x1xf32>
    %124 = vector.broadcast %123 : vector<8x1xf32> to vector<8x32xf32>
    %125 = arith.mulf %120, %124 : vector<8x32xf32>
    %126 = vector.broadcast %106 : vector<1x32xf32> to vector<8x32xf32>
    %127 = arith.mulf %125, %126 : vector<8x32xf32>
    %128 = vector.broadcast %107 : vector<1x32xf32> to vector<8x32xf32>
    %129 = arith.addf %127, %128 : vector<8x32xf32>
    %130 = arith.truncf %129 : vector<8x32xf32> to vector<8x32xbf16>
    %c0_54 = arith.constant 0 : index
    %c0_55 = arith.constant 0 : index
    %131 = vector.load %arg9[%c0_54, %c0_55] : memref<32x64xbf16, #tpu.memory_space<vmem>>, vector<32x64xbf16>
    %cst_56 = arith.constant dense<0.000000e+00> : vector<8x64xf32>
    %132 = tpu.matmul %130, %131, %cst_56 {dimension_numbers = #tpu.dot_dimension_numbers<[1], [0], [0], [1], [0, 0, 1, 1], [], []>} : vector<8x32xbf16>, vector<32x64xbf16>, vector<8x64xf32> -> vector<8x64xf32>
    %c0_57 = arith.constant 0 : index
    %c0_58 = arith.constant 0 : index
    %133 = vector.load %arg10[%c0_57, %c0_58] : memref<1x64xf32, #tpu.memory_space<vmem>>, vector<1x64xf32>
    %134 = vector.broadcast %133 : vector<1x64xf32> to vector<8x64xf32>
    %135 = arith.addf %132, %134 : vector<8x64xf32>
    %cst_59 = arith.constant 0.000000e+00 : f32
    %136 = vector.broadcast %cst_59 : f32 to vector<8x64xf32>
    %137 = arith.maximumf %135, %136 : vector<8x64xf32>
    %138 = arith.truncf %137 : vector<8x64xf32> to vector<8x64xbf16>
    %c0_60 = arith.constant 0 : index
    %c0_61 = arith.constant 0 : index
    %139 = vector.load %arg11[%c0_60, %c0_61] : memref<64x32xbf16, #tpu.memory_space<vmem>>, vector<64x32xbf16>
    %cst_62 = arith.constant dense<0.000000e+00> : vector<8x32xf32>
    %140 = tpu.matmul %138, %139, %cst_62 {dimension_numbers = #tpu.dot_dimension_numbers<[1], [0], [0], [1], [0, 0, 1, 1], [], []>} : vector<8x64xbf16>, vector<64x32xbf16>, vector<8x32xf32> -> vector<8x32xf32>
    %c0_63 = arith.constant 0 : index
    %c0_64 = arith.constant 0 : index
    %141 = vector.load %arg12[%c0_63, %c0_64] : memref<1x32xf32, #tpu.memory_space<vmem>>, vector<1x32xf32>
    %142 = vector.broadcast %141 : vector<1x32xf32> to vector<8x32xf32>
    %143 = arith.addf %140, %142 : vector<8x32xf32>
    %144 = arith.addf %129, %143 : vector<8x32xf32>
    %c0_65 = arith.constant 0 : index
    %c0_66 = arith.constant 0 : index
    %145 = vector.load %arg13[%c0_65, %c0_66] : memref<1x32xf32, #tpu.memory_space<vmem>>, vector<1x32xf32>
    %c0_67 = arith.constant 0 : index
    %c0_68 = arith.constant 0 : index
    %146 = vector.load %arg14[%c0_67, %c0_68] : memref<1x32xf32, #tpu.memory_space<vmem>>, vector<1x32xf32>
    %cst_69 = arith.constant dense<0.000000e+00> : vector<8xf32>
    %147 = vector.multi_reduction <add>, %144, %cst_69 [1] : vector<8x32xf32> to vector<8xf32>
    %148 = vector.shape_cast %147 : vector<8xf32> to vector<8x1xf32>
    %149 = arith.mulf %144, %144 : vector<8x32xf32>
    %cst_70 = arith.constant dense<0.000000e+00> : vector<8xf32>
    %150 = vector.multi_reduction <add>, %149, %cst_70 [1] : vector<8x32xf32> to vector<8xf32>
    %151 = vector.shape_cast %150 : vector<8xf32> to vector<8x1xf32>
    %cst_71 = arith.constant 3.125000e-02 : f32
    %152 = vector.broadcast %cst_71 : f32 to vector<8x1xf32>
    %153 = arith.mulf %148, %152 : vector<8x1xf32>
    %cst_72 = arith.constant 3.125000e-02 : f32
    %154 = vector.broadcast %cst_72 : f32 to vector<8x1xf32>
    %155 = arith.mulf %151, %154 : vector<8x1xf32>
    %156 = arith.mulf %153, %153 : vector<8x1xf32>
    %157 = arith.subf %155, %156 : vector<8x1xf32>
    %158 = vector.broadcast %153 : vector<8x1xf32> to vector<8x32xf32>
    %159 = arith.subf %144, %158 : vector<8x32xf32>
    %cst_73 = arith.constant 9.99999974E-6 : f32
    %160 = vector.broadcast %cst_73 : f32 to vector<8x1xf32>
    %161 = arith.addf %157, %160 : vector<8x1xf32>
    %162 = math.rsqrt %161 : vector<8x1xf32>
    %163 = vector.broadcast %162 : vector<8x1xf32> to vector<8x32xf32>
    %164 = arith.mulf %159, %163 : vector<8x32xf32>
    %165 = vector.broadcast %145 : vector<1x32xf32> to vector<8x32xf32>
    %166 = arith.mulf %164, %165 : vector<8x32xf32>
    %167 = vector.broadcast %146 : vector<1x32xf32> to vector<8x32xf32>
    %168 = arith.addf %166, %167 : vector<8x32xf32>
    %c0_74 = arith.constant 0 : index
    %c0_75 = arith.constant 0 : index
    %169 = vector.load %arg15[%c0_74, %c0_75] : memref<8x32xf32, #tpu.memory_space<vmem>>, vector<8x32xf32>
    tpu.vector_store %arg15[%c0_74, %c0_75], %168 {strides = array<i32>} : memref<8x32xf32, #tpu.memory_space<vmem>>, vector<8x32xf32>,
    return
  }
  func.func @transform_0(%arg0: i32) -> (i32, i32) {
    %c0_i32 = arith.constant 0 : i32
    %c0_i32_0 = arith.constant 0 : i32
    return %arg0, %c0_i32 : i32, i32
  }
  func.func @transform_1(%arg0: i32) -> (i32, i32, i32) {
    %c0_i32 = arith.constant 0 : i32
    %c0_i32_0 = arith.constant 0 : i32
    %c0_i32_1 = arith.constant 0 : i32
    return %arg0, %c0_i32, %c0_i32_0 : i32, i32, i32
  }
  func.func @transform_2(%arg0: i32) -> (i32, i32) {
    %c0_i32 = arith.constant 0 : i32
    %c0_i32_0 = arith.constant 0 : i32
    %c0_i32_1 = arith.constant 0 : i32
    return %c0_i32, %c0_i32_0 : i32, i32
  }
  func.func @transform_3(%arg0: i32) -> (i32, i32) {
    %c0_i32 = arith.constant 0 : i32
    %c0_i32_0 = arith.constant 0 : i32
    %c0_i32_1 = arith.constant 0 : i32
    return %c0_i32, %c0_i32_0 : i32, i32
  }
  func.func @transform_4(%arg0: i32) -> (i32, i32) {
    %c0_i32 = arith.constant 0 : i32
    %c0_i32_0 = arith.constant 0 : i32
    %c0_i32_1 = arith.constant 0 : i32
    return %c0_i32, %c0_i32_0 : i32, i32
  }
  func.func @transform_5(%arg0: i32) -> (i32, i32) {
    %c0_i32 = arith.constant 0 : i32
    %c0_i32_0 = arith.constant 0 : i32
    %c0_i32_1 = arith.constant 0 : i32
    return %c0_i32, %c0_i32_0 : i32, i32
  }
  func.func @transform_6(%arg0: i32) -> (i32, i32) {
    %c0_i32 = arith.constant 0 : i32
    %c0_i32_0 = arith.constant 0 : i32
    %c0_i32_1 = arith.constant 0 : i32
    return %c0_i32, %c0_i32_0 : i32, i32
  }
  func.func @transform_7(%arg0: i32) -> (i32, i32) {
    %c0_i32 = arith.constant 0 : i32
    %c0_i32_0 = arith.constant 0 : i32
    %c0_i32_1 = arith.constant 0 : i32
    return %c0_i32, %c0_i32_0 : i32, i32
  }
  func.func @transform_8(%arg0: i32) -> (i32, i32) {
    %c0_i32 = arith.constant 0 : i32
    %c0_i32_0 = arith.constant 0 : i32
    %c0_i32_1 = arith.constant 0 : i32
    return %c0_i32, %c0_i32_0 : i32, i32
  }
  func.func @transform_9(%arg0: i32) -> (i32, i32) {
    %c0_i32 = arith.constant 0 : i32
    %c0_i32_0 = arith.constant 0 : i32
    %c0_i32_1 = arith.constant 0 : i32
    return %c0_i32, %c0_i32_0 : i32, i32
  }
  func.func @transform_10(%arg0: i32) -> (i32, i32) {
    %c0_i32 = arith.constant 0 : i32
    %c0_i32_0 = arith.constant 0 : i32
    %c0_i32_1 = arith.constant 0 : i32
    return %c0_i32, %c0_i32_0 : i32, i32
  }
  func.func @transform_11(%arg0: i32) -> (i32, i32) {
    %c0_i32 = arith.constant 0 : i32
    %c0_i32_0 = arith.constant 0 : i32
    %c0_i32_1 = arith.constant 0 : i32
    return %c0_i32, %c0_i32_0 : i32, i32
  }
  func.func @transform_12(%arg0: i32) -> (i32, i32) {
    %c0_i32 = arith.constant 0 : i32
    %c0_i32_0 = arith.constant 0 : i32
    %c0_i32_1 = arith.constant 0 : i32
    return %c0_i32, %c0_i32_0 : i32, i32
  }
  func.func @transform_13(%arg0: i32) -> (i32, i32) {
    %c0_i32 = arith.constant 0 : i32
    %c0_i32_0 = arith.constant 0 : i32
    %c0_i32_1 = arith.constant 0 : i32
    return %c0_i32, %c0_i32_0 : i32, i32
  }
  func.func @transform_14(%arg0: i32) -> (i32, i32) {
    %c0_i32 = arith.constant 0 : i32
    %c0_i32_0 = arith.constant 0 : i32
    return %arg0, %c0_i32 : i32, i32
  }
}

</mosaic_0001>

<llo_original>
// kernel: tpu_custom_call.1
$region0: #{tpu_custom_call.1}
  #allocation0 [shape = 'u32[]', space=smem, size = 0x4, offset = 0x4, fixed_abs, tag = 'smem constant byte address 0x4 - core index']
  #allocation1 [shape = 'u32[144,128]{1,0:T(1,128)}', space=vmem, size = 0x12000, scoped, tag = 'internal scratch']
  #allocation2 [shape = 'f32[1,8,32]{2,1,0:T(8,128)}', space=vmem, size = 0x1000, scoped, tag = 'scratch operand']
  %s0 = inlined_call_operand.vmem [shape: f32[16,32], index: 0, kind: input, shape index: {}]
  %s1 = inlined_call_operand.hbm [shape: f32[2,1,8], index: 1, kind: input, shape index: {}]
  %s2 = inlined_call_operand.vmem [shape: bf16[32,96], index: 2, kind: input, shape index: {}]
  %s3 = inlined_call_operand.vmem [shape: f32[1,96], index: 3, kind: input, shape index: {}]
  %s4 = inlined_call_operand.vmem [shape: bf16[32,32], index: 4, kind: input, shape index: {}]
  %s5 = inlined_call_operand.vmem [shape: f32[1,32], index: 5, kind: input, shape index: {}]
  %s6 = inlined_call_operand.hbm [shape: f32[1,32], index: 6, kind: input, shape index: {}]
  %s7 = inlined_call_operand.hbm [shape: f32[1,32], index: 7, kind: input, shape index: {}]
  %s8 = inlined_call_operand.hbm [shape: bf16[32,64], index: 8, kind: input, shape index: {}]
  %s9 = inlined_call_operand.hbm [shape: f32[1,64], index: 9, kind: input, shape index: {}]
  %s10 = inlined_call_operand.vmem [shape: bf16[64,32], index: 10, kind: input, shape index: {}]
  %s11 = inlined_call_operand.vmem [shape: f32[1,32], index: 11, kind: input, shape index: {}]
  %s12 = inlined_call_operand.vmem [shape: f32[1,32], index: 12, kind: input, shape index: {}]
  %s13 = inlined_call_operand.vmem [shape: f32[1,32], index: 13, kind: input, shape index: {}]
  %s14 = inlined_call_operand.hbm [shape: f32[16,32], index: 14, kind: output, shape index: {}]
  %s15 = sld [smem:[#allocation0]]
  $region109: #{tpu_custom_call.1} parent=0
    _
  %s17 = ssub.s32 1, %s15
  %s18 = scalar_select 0, %s17, %s15
  $region1: #{tpu_custom_call.1} parent=0
    #allocation3 [shape = 'u8[1024]{0}', space=vmem, size = 0x400, scoped, tag = 'input window, operand 1']
    #allocation4 [shape = 's32[2]{0}', space=sflag, size = 0x8, scoped, tag = 'scoped memory for tpu_custom_call.1']
    #allocation5 [shape = 's32[2]{0}', space=sflag, size = 0x8, scoped, tag = 'scoped memory for tpu_custom_call.1']
    #allocation6 [shape = 'u8[512]{0}', space=vmem, size = 0x400, scoped, tag = 'input window, operand 6, single buffered']
    #allocation7 [shape = 's32[1]{0}', space=sflag, size = 0x4, scoped, tag = 'scoped memory for tpu_custom_call.1']
    #allocation8 [shape = 'u8[512]{0}', space=vmem, size = 0x400, scoped, tag = 'input window, operand 7, single buffered']
    #allocation9 [shape = 'u8[8192]{0}', space=vmem, size = 0x2000, scoped, tag = 'input window, operand 8, single buffered']
    #allocation10 [shape = 's32[1]{0}', space=sflag, size = 0x4, scoped, tag = 'scoped memory for tpu_custom_call.1']
    #allocation11 [shape = 'u8[512]{0}', space=vmem, size = 0x400, scoped, tag = 'input window, operand 9, single buffered']
    #allocation12 [shape = 'u8[8192]{0}', space=vmem, size = 0x2000, scoped, tag = 'output window, operand 0']
    %19 = vsyncpa [#allocation4], 0
    %s20 = scalar_lea.sflag [#allocation4], 1
    %21 = vsyncpa %s20, 0
    %22 = vsyncpa [#allocation7], 0
    %23 = vsyncpa [#allocation10], 0
    %24 = vsyncpa [#allocation5], 0
    %s25 = scalar_lea.sflag [#allocation5], 1
    %26 = vsyncpa %s25, 0
    loop: start=0, step=1, limit=4
    $region2: #{tpu_custom_call.1} parent=1 // loop_pre_header
      _
    $region3: #{tpu_custom_call.1} parent=1 // loop_header
      %s28 = sphi 0, %s32
      %p29 = scmp.ge.s32.totalorder %s28, 4
      %s38 = sphi 0, %s40
      %s41 = sphi 0, %s38
      %s42 = sphi 0, %s41
      %s58 = sphi 0, %s42
      %s64 = sphi 0, %s66
      %s67 = sphi 0, %s64
      %s68 = sphi 0, %s67
      %s84 = sphi 0, %s68
      %s88 = sphi 0, %s88
      %s90 = sphi 0, %s88
      %s91 = sphi 0, %s90
      %s105 = sphi 0, %s91
      %s109 = sphi 0, %s109
      %s111 = sphi 0, %s109
      %s112 = sphi 0, %s111
      %s126 = sphi 0, %s112
      %s130 = sphi 0, %s130
      %s132 = sphi 0, %s130
      %s133 = sphi 0, %s132
      %s147 = sphi 0, %s133
      %s151 = sphi 0, %s151
      %s153 = sphi 0, %s151
      %s154 = sphi 0, %s153
      %s168 = sphi 0, %s154
      %s172 = sphi 0, %s172
      %s174 = sphi 0, %s172
      %s175 = sphi 0, %s174
      %s189 = sphi 0, %s175
      %s193 = sphi 0, %s193
      %s195 = sphi 0, %s193
      %s196 = sphi 0, %s195
      %s210 = sphi 0, %s196
      %s214 = sphi 0, %s214
      %s216 = sphi 0, %s214
      %s217 = sphi 0, %s216
      %s231 = sphi 0, %s217
      %s235 = sphi 0, %s235
      %s237 = sphi 0, %s235
      %s238 = sphi 0, %s237
      %s252 = sphi 0, %s238
      %s256 = sphi 0, %s256
      %s258 = sphi 0, %s256
      %s259 = sphi 0, %s258
      %s273 = sphi 0, %s259
      %s277 = sphi 0, %s277
      %s279 = sphi 0, %s277
      %s280 = sphi 0, %s279
      %s294 = sphi 0, %s280
      %s298 = sphi 0, %s298
      %s300 = sphi 0, %s298
      %s301 = sphi 0, %s300
      %s315 = sphi 0, %s301
      %s319 = sphi 0, %s319
      %s321 = sphi 0, %s319
      %s322 = sphi 0, %s321
      %s336 = sphi 0, %s322
      %s342 = sphi 0, %s344
      %s345 = sphi 0, %s342
      %s346 = sphi 0, %s345
      %s362 = sphi 0, %s346
    $region4: #{tpu_custom_call.1} parent=1 // loop_header_branch
      %31 = sbr.rel (%p29) target = $region8
    $region5: #{tpu_custom_call.1} parent=1 // loop_body
      %s33 = ssub.s32 %s28, 1
      %s34 = ssub.s32 %s28, 2
      %s35 = sadd.s32 %s28, 1
      %s36 = ssub.s32 %s28, %s35
      %p37 = scmp.eq.s32.totalorder %s36, 0
      %s39 = sadd.s32 %s38, 1
      %s40 = scalar_select %p37, %s38, %s39
      %p43 = pneg %p37
      %p44 = scmp.eq.s32.totalorder %s28, 1
      %p45 = por %p43, %p44
      %p46 = scmp.ne.s32.totalorder %s38, %s41
      %p47 = scmp.eq.s32.totalorder %s28, 0
      %p48 = por %p46, %p47
      %p49 = scmp.ne.s32.totalorder %s38, %s41
      %p50 = scmp.eq.s32.totalorder %s33, 1
      %p51 = por %p49, %p50
      %p52 = scmp.ne.s32.totalorder %s41, %s42
      %p53 = scmp.eq.s32.totalorder %s33, 0
      %p54 = por %p52, %p53
      %p55 = scmp.ne.s32.totalorder %s41, %s42
      %p56 = scmp.eq.s32.totalorder %s34, 1
      %p57 = por %p55, %p56
      %p59 = scmp.ne.s32.totalorder %s42, %s58
      %p60 = scmp.eq.s32.totalorder %s34, 0
      %p61 = por %p59, %p60
      %s62 = ssub.s32 %s28, %s35
      %p63 = scmp.eq.s32.totalorder %s62, 0
      %s65 = sadd.s32 %s64, 1
      %s66 = scalar_select %p63, %s64, %s65
      %p69 = pneg %p63
      %p70 = scmp.eq.s32.totalorder %s28, 1
      %p71 = por %p69, %p70
      %p72 = scmp.ne.s32.totalorder %s64, %s67
      %p73 = scmp.eq.s32.totalorder %s28, 0
      %p74 = por %p72, %p73
      %p75 = scmp.ne.s32.totalorder %s64, %s67
      %p76 = scmp.eq.s32.totalorder %s33, 1
      %p77 = por %p75, %p76
      %p78 = scmp.ne.s32.totalorder %s67, %s68
      %p79 = scmp.eq.s32.totalorder %s33, 0
      %p80 = por %p78, %p79
      %p81 = scmp.ne.s32.totalorder %s67, %s68
      %p82 = scmp.eq.s32.totalorder %s34, 1
      %p83 = por %p81, %p82
      %p85 = scmp.ne.s32.totalorder %s68, %s84
      %p86 = scmp.eq.s32.totalorder %s34, 0
      %p87 = por %p85, %p86
      %s89 = sadd.s32 %s88, 1
      %p92 = scmp.eq.s32.totalorder %s28, 1
      %p93 = scmp.ne.s32.totalorder %s88, %s90
      %p94 = scmp.eq.s32.totalorder %s28, 0
      %p95 = por %p93, %p94
      %p96 = scmp.ne.s32.totalorder %s88, %s90
      %p97 = scmp.eq.s32.totalorder %s33, 1
      %p98 = por %p96, %p97
      %p99 = scmp.ne.s32.totalorder %s90, %s91
      %p100 = scmp.eq.s32.totalorder %s33, 0
      %p101 = por %p99, %p100
      %p102 = scmp.ne.s32.totalorder %s90, %s91
      %p103 = scmp.eq.s32.totalorder %s34, 1
      %p104 = por %p102, %p103
      %p106 = scmp.ne.s32.totalorder %s91, %s105
      %p107 = scmp.eq.s32.totalorder %s34, 0
      %p108 = por %p106, %p107
      %s110 = sadd.s32 %s109, 1
      %p113 = scmp.eq.s32.totalorder %s28, 1
      %p114 = scmp.ne.s32.totalorder %s109, %s111
      %p115 = scmp.eq.s32.totalorder %s28, 0
      %p116 = por %p114, %p115
      %p117 = scmp.ne.s32.totalorder %s109, %s111
      %p118 = scmp.eq.s32.totalorder %s33, 1
      %p119 = por %p117, %p118
      %p120 = scmp.ne.s32.totalorder %s111, %s112
      %p121 = scmp.eq.s32.totalorder %s33, 0
      %p122 = por %p120, %p121
      %p123 = scmp.ne.s32.totalorder %s111, %s112
      %p124 = scmp.eq.s32.totalorder %s34, 1
      %p125 = por %p123, %p124
      %p127 = scmp.ne.s32.totalorder %s112, %s126
      %p128 = scmp.eq.s32.totalorder %s34, 0
      %p129 = por %p127, %p128
      %s131 = sadd.s32 %s130, 1
      %p134 = scmp.eq.s32.totalorder %s28, 1
      %p135 = scmp.ne.s32.totalorder %s130, %s132
      %p136 = scmp.eq.s32.totalorder %s28, 0
      %p137 = por %p135, %p136
      %p138 = scmp.ne.s32.totalorder %s130, %s132
      %p139 = scmp.eq.s32.totalorder %s33, 1
      %p140 = por %p138, %p139
      %p141 = scmp.ne.s32.totalorder %s132, %s133
      %p142 = scmp.eq.s32.totalorder %s33, 0
      %p143 = por %p141, %p142
      %p144 = scmp.ne.s32.totalorder %s132, %s133
      %p145 = scmp.eq.s32.totalorder %s34, 1
      %p146 = por %p144, %p145
      %p148 = scmp.ne.s32.totalorder %s133, %s147
      %p149 = scmp.eq.s32.totalorder %s34, 0
      %p150 = por %p148, %p149
      %s152 = sadd.s32 %s151, 1
      %p155 = scmp.eq.s32.totalorder %s28, 1
      %p156 = scmp.ne.s32.totalorder %s151, %s153
      %p157 = scmp.eq.s32.totalorder %s28, 0
      %p158 = por %p156, %p157
      %p159 = scmp.ne.s32.totalorder %s151, %s153
      %p160 = scmp.eq.s32.totalorder %s33, 1
      %p161 = por %p159, %p160
      %p162 = scmp.ne.s32.totalorder %s153, %s154
      %p163 = scmp.eq.s32.totalorder %s33, 0
      %p164 = por %p162, %p163
      %p165 = scmp.ne.s32.totalorder %s153, %s154
      %p166 = scmp.eq.s32.totalorder %s34, 1
      %p167 = por %p165, %p166
      %p169 = scmp.ne.s32.totalorder %s154, %s168
      %p170 = scmp.eq.s32.totalorder %s34, 0
      %p171 = por %p169, %p170
      %s173 = sadd.s32 %s172, 1
      %p176 = scmp.eq.s32.totalorder %s28, 1
      %p177 = scmp.ne.s32.totalorder %s172, %s174
      %p178 = scmp.eq.s32.totalorder %s28, 0
      %p179 = por %p177, %p178
      %p180 = scmp.ne.s32.totalorder %s172, %s174
      %p181 = scmp.eq.s32.totalorder %s33, 1
      %p182 = por %p180, %p181
      %p183 = scmp.ne.s32.totalorder %s174, %s175
      %p184 = scmp.eq.s32.totalorder %s33, 0
      %p185 = por %p183, %p184
      %p186 = scmp.ne.s32.totalorder %s174, %s175
      %p187 = scmp.eq.s32.totalorder %s34, 1
      %p188 = por %p186, %p187
      %p190 = scmp.ne.s32.totalorder %s175, %s189
      %p191 = scmp.eq.s32.totalorder %s34, 0
      %p192 = por %p190, %p191
      %s194 = sadd.s32 %s193, 1
      %p197 = scmp.eq.s32.totalorder %s28, 1
      %p198 = scmp.ne.s32.totalorder %s193, %s195
      %p199 = scmp.eq.s32.totalorder %s28, 0
      %p200 = por %p198, %p199
      %p201 = scmp.ne.s32.totalorder %s193, %s195
      %p202 = scmp.eq.s32.totalorder %s33, 1
      %p203 = por %p201, %p202
      %p204 = scmp.ne.s32.totalorder %s195, %s196
      %p205 = scmp.eq.s32.totalorder %s33, 0
      %p206 = por %p204, %p205
      %p207 = scmp.ne.s32.totalorder %s195, %s196
      %p208 = scmp.eq.s32.totalorder %s34, 1
      %p209 = por %p207, %p208
      %p211 = scmp.ne.s32.totalorder %s196, %s210
      %p212 = scmp.eq.s32.totalorder %s34, 0
      %p213 = por %p211, %p212
      %s215 = sadd.s32 %s214, 1
      %p218 = scmp.eq.s32.totalorder %s28, 1
      %p219 = scmp.ne.s32.totalorder %s214, %s216
      %p220 = scmp.eq.s32.totalorder %s28, 0
      %p221 = por %p219, %p220
      %p222 = scmp.ne.s32.totalorder %s214, %s216
      %p223 = scmp.eq.s32.totalorder %s33, 1
      %p224 = por %p222, %p223
      %p225 = scmp.ne.s32.totalorder %s216, %s217
      %p226 = scmp.eq.s32.totalorder %s33, 0
      %p227 = por %p225, %p226
      %p228 = scmp.ne.s32.totalorder %s216, %s217
      %p229 = scmp.eq.s32.totalorder %s34, 1
      %p230 = por %p228, %p229
      %p232 = scmp.ne.s32.totalorder %s217, %s231
      %p233 = scmp.eq.s32.totalorder %s34, 0
      %p234 = por %p232, %p233
      %s236 = sadd.s32 %s235, 1
      %p239 = scmp.eq.s32.totalorder %s28, 1
      %p240 = scmp.ne.s32.totalorder %s235, %s237
      %p241 = scmp.eq.s32.totalorder %s28, 0
      %p242 = por %p240, %p241
      %p243 = scmp.ne.s32.totalorder %s235, %s237
      %p244 = scmp.eq.s32.totalorder %s33, 1
      %p245 = por %p243, %p244
      %p246 = scmp.ne.s32.totalorder %s237, %s238
      %p247 = scmp.eq.s32.totalorder %s33, 0
      %p248 = por %p246, %p247
      %p249 = scmp.ne.s32.totalorder %s237, %s238
      %p250 = scmp.eq.s32.totalorder %s34, 1
      %p251 = por %p249, %p250
      %p253 = scmp.ne.s32.totalorder %s238, %s252
      %p254 = scmp.eq.s32.totalorder %s34, 0
      %p255 = por %p253, %p254
      %s257 = sadd.s32 %s256, 1
      %p260 = scmp.eq.s32.totalorder %s28, 1
      %p261 = scmp.ne.s32.totalorder %s256, %s258
      %p262 = scmp.eq.s32.totalorder %s28, 0
      %p263 = por %p261, %p262
      %p264 = scmp.ne.s32.totalorder %s256, %s258
      %p265 = scmp.eq.s32.totalorder %s33, 1
      %p266 = por %p264, %p265
      %p267 = scmp.ne.s32.totalorder %s258, %s259
      %p268 = scmp.eq.s32.totalorder %s33, 0
      %p269 = por %p267, %p268
      %p270 = scmp.ne.s32.totalorder %s258, %s259
      %p271 = scmp.eq.s32.totalorder %s34, 1
      %p272 = por %p270, %p271
      %p274 = scmp.ne.s32.totalorder %s259, %s273
      %p275 = scmp.eq.s32.totalorder %s34, 0
      %p276 = por %p274, %p275
      %s278 = sadd.s32 %s277, 1
      %p281 = scmp.eq.s32.totalorder %s28, 1
      %p282 = scmp.ne.s32.totalorder %s277, %s279
      %p283 = scmp.eq.s32.totalorder %s28, 0
      %p284 = por %p282, %p283
      %p285 = scmp.ne.s32.totalorder %s277, %s279
      %p286 = scmp.eq.s32.totalorder %s33, 1
      %p287 = por %p285, %p286
      %p288 = scmp.ne.s32.totalorder %s279, %s280
      %p289 = scmp.eq.s32.totalorder %s33, 0
      %p290 = por %p288, %p289
      %p291 = scmp.ne.s32.totalorder %s279, %s280
      %p292 = scmp.eq.s32.totalorder %s34, 1
      %p293 = por %p291, %p292
      %p295 = scmp.ne.s32.totalorder %s280, %s294
      %p296 = scmp.eq.s32.totalorder %s34, 0
      %p297 = por %p295, %p296
      %s299 = sadd.s32 %s298, 1
      %p302 = scmp.eq.s32.totalorder %s28, 1
      %p303 = scmp.ne.s32.totalorder %s298, %s300
      %p304 = scmp.eq.s32.totalorder %s28, 0
      %p305 = por %p303, %p304
      %p306 = scmp.ne.s32.totalorder %s298, %s300
      %p307 = scmp.eq.s32.totalorder %s33, 1
      %p308 = por %p306, %p307
      %p309 = scmp.ne.s32.totalorder %s300, %s301
      %p310 = scmp.eq.s32.totalorder %s33, 0
      %p311 = por %p309, %p310
      %p312 = scmp.ne.s32.totalorder %s300, %s301
      %p313 = scmp.eq.s32.totalorder %s34, 1
      %p314 = por %p312, %p313
      %p316 = scmp.ne.s32.totalorder %s301, %s315
      %p317 = scmp.eq.s32.totalorder %s34, 0
      %p318 = por %p316, %p317
      %s320 = sadd.s32 %s319, 1
      %p323 = scmp.eq.s32.totalorder %s28, 1
      %p324 = scmp.ne.s32.totalorder %s319, %s321
      %p325 = scmp.eq.s32.totalorder %s28, 0
      %p326 = por %p324, %p325
      %p327 = scmp.ne.s32.totalorder %s319, %s321
      %p328 = scmp.eq.s32.totalorder %s33, 1
      %p329 = por %p327, %p328
      %p330 = scmp.ne.s32.totalorder %s321, %s322
      %p331 = scmp.eq.s32.totalorder %s33, 0
      %p332 = por %p330, %p331
      %p333 = scmp.ne.s32.totalorder %s321, %s322
      %p334 = scmp.eq.s32.totalorder %s34, 1
      %p335 = por %p333, %p334
      %p337 = scmp.ne.s32.totalorder %s322, %s336
      %p338 = scmp.eq.s32.totalorder %s34, 0
      %p339 = por %p337, %p338
      %s340 = ssub.s32 %s28, %s35
      %p341 = scmp.eq.s32.totalorder %s340, 0
      %s343 = sadd.s32 %s342, 1
      %s344 = scalar_select %p341, %s342, %s343
      %p347 = pneg %p341
      %p348 = scmp.eq.s32.totalorder %s28, 1
      %p349 = por %p347, %p348
      %p350 = scmp.ne.s32.totalorder %s342, %s345
      %p351 = scmp.eq.s32.totalorder %s28, 0
      %p352 = por %p350, %p351
      %p353 = scmp.ne.s32.totalorder %s342, %s345
      %p354 = scmp.eq.s32.totalorder %s33, 1
      %p355 = por %p353, %p354
      %p356 = scmp.ne.s32.totalorder %s345, %s346
      %p357 = scmp.eq.s32.totalorder %s33, 0
      %p358 = por %p356, %p357
      %p359 = scmp.ne.s32.totalorder %s345, %s346
      %p360 = scmp.eq.s32.totalorder %s34, 1
      %p361 = por %p359, %p360
      %p363 = scmp.ne.s32.totalorder %s346, %s362
      %p364 = scmp.eq.s32.totalorder %s34, 0
      %p365 = por %p363, %p364
      %p366 = scmp.le.s32.totalorder 1, %s28
      %p367 = scmp.lt.s32.totalorder %s28, 3
      %p368 = pnand %p366, %p367
      %p369 = pneg %p368
      // Predicated region
      $region9: #{tpu_custom_call.1} parent=5 // pred_check
        _
      $region10: #{tpu_custom_call.1} parent=5 // pred_check_branch
        %371 = sbr.rel (%p368) target = $region12
      $region11: #{tpu_custom_call.1} parent=5 // pred_region
        %s372 = ssub.s32 %s28, 1
        // Predicated region
        $region13: #{tpu_custom_call.1} parent=11 // pred_check
          %p373 = pneg %p101
        $region14: #{tpu_custom_call.1} parent=11 // pred_check_branch
          %375 = sbr.rel (%p373) target = $region16
        $region15: #{tpu_custom_call.1} parent=11 // pred_region
          _
        $region16: #{tpu_custom_call.1} parent=11 // pred_fallthru
          _
        // Predicated region
        $region17: #{tpu_custom_call.1} parent=11 // pred_check
          %p376 = pneg %p122
        $region18: #{tpu_custom_call.1} parent=11 // pred_check_branch
          %378 = sbr.rel (%p376) target = $region20
        $region19: #{tpu_custom_call.1} parent=11 // pred_region
          _
        $region20: #{tpu_custom_call.1} parent=11 // pred_fallthru
          _
        // Predicated region
        $region21: #{tpu_custom_call.1} parent=11 // pred_check
          %p379 = pneg %p143
        $region22: #{tpu_custom_call.1} parent=11 // pred_check_branch
          %381 = sbr.rel (%p379) target = $region24
        $region23: #{tpu_custom_call.1} parent=11 // pred_region
          _
        $region24: #{tpu_custom_call.1} parent=11 // pred_fallthru
          _
        // Predicated region
        $region25: #{tpu_custom_call.1} parent=11 // pred_check
          %p382 = pneg %p164
        $region26: #{tpu_custom_call.1} parent=11 // pred_check_branch
          %384 = sbr.rel (%p382) target = $region28
        $region27: #{tpu_custom_call.1} parent=11 // pred_region
          _
        $region28: #{tpu_custom_call.1} parent=11 // pred_fallthru
          _
        // Predicated region
        $region29: #{tpu_custom_call.1} parent=11 // pred_check
          %p385 = pneg %p185
        $region30: #{tpu_custom_call.1} parent=11 // pred_check_branch
          %387 = sbr.rel (%p385) target = $region32
        $region31: #{tpu_custom_call.1} parent=11 // pred_region
          %s389 = ssub.s32 16, 16
          %390 = vsyncadd [#allocation7], %s389
          %s392 = sshll.u32 [#allocation6], 4
          %s393 = int_to_ptr.vmem [resolvable:$true] %s392
          %395 = dma.hbm_to_vmem [thread:$0]  %s6, 16, %s393, [#allocation7]
        $region32: #{tpu_custom_call.1} parent=11 // pred_fallthru
          _
        // Predicated region
        $region33: #{tpu_custom_call.1} parent=11 // pred_check
          %p396 = pneg %p206
        $region34: #{tpu_custom_call.1} parent=11 // pred_check_branch
          %398 = sbr.rel (%p396) target = $region36
        $region35: #{tpu_custom_call.1} parent=11 // pred_region
          %s400 = ssub.s32 16, 16
          %401 = vsyncadd [#allocation7], %s400
          %s403 = sshll.u32 [#allocation8], 4
          %s404 = int_to_ptr.vmem [resolvable:$true] %s403
          %406 = dma.hbm_to_vmem [thread:$0]  %s7, 16, %s404, [#allocation7]
        $region36: #{tpu_custom_call.1} parent=11 // pred_fallthru
          _
        // Predicated region
        $region37: #{tpu_custom_call.1} parent=11 // pred_check
          %p407 = pneg %p227
        $region38: #{tpu_custom_call.1} parent=11 // pred_check_branch
          %409 = sbr.rel (%p407) target = $region40
        $region39: #{tpu_custom_call.1} parent=11 // pred_region
          %s411 = ssub.s32 256, 256
          %412 = vsyncadd [#allocation10], %s411
          %s413 = sshll.u32 [#allocation9], 4
          %s414 = int_to_ptr.vmem [resolvable:$true] %s413
          %419 = dma.hbm_to_vmem [thread:$0]  %s8, 256, %s414, [#allocation10], 64, 64, 4
        $region40: #{tpu_custom_call.1} parent=11 // pred_fallthru
          _
        // Predicated region
        $region41: #{tpu_custom_call.1} parent=11 // pred_check
          %p420 = pneg %p248
        $region42: #{tpu_custom_call.1} parent=11 // pred_check_branch
          %422 = sbr.rel (%p420) target = $region44
        $region43: #{tpu_custom_call.1} parent=11 // pred_region
          %s424 = ssub.s32 16, 16
          %425 = vsyncadd [#allocation10], %s424
          %s427 = sshll.u32 [#allocation11], 4
          %s428 = int_to_ptr.vmem [resolvable:$true] %s427
          %430 = dma.hbm_to_vmem [thread:$0]  %s9, 16, %s428, [#allocation10]
        $region44: #{tpu_custom_call.1} parent=11 // pred_fallthru
          _
        // Predicated region
        $region45: #{tpu_custom_call.1} parent=11 // pred_check
          %p431 = pneg %p269
        $region46: #{tpu_custom_call.1} parent=11 // pred_check_branch
          %433 = sbr.rel (%p431) target = $region48
        $region47: #{tpu_custom_call.1} parent=11 // pred_region
          _
        $region48: #{tpu_custom_call.1} parent=11 // pred_fallthru
          _
        // Predicated region
        $region49: #{tpu_custom_call.1} parent=11 // pred_check
          %p434 = pneg %p290
        $region50: #{tpu_custom_call.1} parent=11 // pred_check_branch
          %436 = sbr.rel (%p434) target = $region52
        $region51: #{tpu_custom_call.1} parent=11 // pred_region
          _
        $region52: #{tpu_custom_call.1} parent=11 // pred_fallthru
          _
        // Predicated region
        $region53: #{tpu_custom_call.1} parent=11 // pred_check
          %p437 = pneg %p311
        $region54: #{tpu_custom_call.1} parent=11 // pred_check_branch
          %439 = sbr.rel (%p437) target = $region56
        $region55: #{tpu_custom_call.1} parent=11 // pred_region
          _
        $region56: #{tpu_custom_call.1} parent=11 // pred_fallthru
          _
        // Predicated region
        $region57: #{tpu_custom_call.1} parent=11 // pred_check
          %p440 = pneg %p332
        $region58: #{tpu_custom_call.1} parent=11 // pred_check_branch
          %442 = sbr.rel (%p440) target = $region60
        $region59: #{tpu_custom_call.1} parent=11 // pred_region
          _
        $region60: #{tpu_custom_call.1} parent=11 // pred_fallthru
          _
      $region12: #{tpu_custom_call.1} parent=5 // pred_fallthru
        _
      %p443 = scmp.lt.s32.totalorder %s28, 2
      // Predicated region
      $region61: #{tpu_custom_call.1} parent=5 // pred_check
        %p444 = pneg %p443
      $region62: #{tpu_custom_call.1} parent=5 // pred_check_branch
        %446 = sbr.rel (%p444) target = $region64
      $region63: #{tpu_custom_call.1} parent=5 // pred_region
        // Predicated region
        $region65: #{tpu_custom_call.1} parent=63 // pred_check
          %p447 = pneg %p48
        $region66: #{tpu_custom_call.1} parent=63 // pred_check_branch
          %449 = sbr.rel (%p447) target = $region68
        $region67: #{tpu_custom_call.1} parent=63 // pred_region
          %p450 = scmp.lt.s32.totalorder %s28, 1
          %s451 = scalar_select %p450, %s28, 1
          %s452 = smul.addr %s451, 8
          %s453 = scalar_lea.vmem %s0, %s452
        $region68: #{tpu_custom_call.1} parent=63 // pred_fallthru
          _
        // Predicated region
        $region69: #{tpu_custom_call.1} parent=63 // pred_check
          %p454 = pneg %p74
        $region70: #{tpu_custom_call.1} parent=63 // pred_check_branch
          %456 = sbr.rel (%p454) target = $region72
        $region71: #{tpu_custom_call.1} parent=63 // pred_region
          %s457 = sand.u32 %s64, 1
          %s458 = scalar_lea.sflag [#allocation4], %s457
          %s459 = sand.u32 %s64, 1
          %s460 = scalar_lea.vmem [#allocation3], %s459
          %s462 = ssub.s32 16, 16
          %463 = vsyncadd %s458, %s462
          %s464 = smul.addr %s28, 16
          %s465 = scalar_lea.hbm %s1, %s464
          %s467 = sshll.u32 %s460, 4
          %s468 = int_to_ptr.vmem [resolvable:$true] %s467
          %470 = dma.hbm_to_vmem [thread:$0]  %s465, 16, %s468, %s458
        $region72: #{tpu_custom_call.1} parent=63 // pred_fallthru
          _
      $region64: #{tpu_custom_call.1} parent=5 // pred_fallthru
        _
      %p471 = scmp.le.s32.totalorder 1, %s28
      %p472 = scmp.lt.s32.totalorder %s28, 3
      %p473 = pnand %p471, %p472
      %p474 = pneg %p473
      // Predicated region
      $region73: #{tpu_custom_call.1} parent=5 // pred_check
        _
      $region74: #{tpu_custom_call.1} parent=5 // pred_check_branch
        %476 = sbr.rel (%p473) target = $region76
      $region75: #{tpu_custom_call.1} parent=5 // pred_region
        %s477 = ssub.s32 %s28, 1
        %s478 = sand.u32 %s67, 1
        %s479 = scalar_lea.sflag [#allocation4], %s478
        %s480 = sand.u32 %s67, 1
        %s481 = scalar_lea.vmem [#allocation3], %s480
        // Predicated region
        $region77: #{tpu_custom_call.1} parent=75 // pred_check
          %p482 = pneg %p80
        $region78: #{tpu_custom_call.1} parent=75 // pred_check_branch
          %484 = sbr.rel (%p482) target = $region80
        $region79: #{tpu_custom_call.1} parent=75 // pred_region
          %485 = dma.done %s479, 16
        $region80: #{tpu_custom_call.1} parent=75 // pred_fallthru
          _
        // Predicated region
        $region81: #{tpu_custom_call.1} parent=75 // pred_check
          %p486 = pneg %p185
        $region82: #{tpu_custom_call.1} parent=75 // pred_check_branch
          %488 = sbr.rel (%p486) target = $region84
        $region83: #{tpu_custom_call.1} parent=75 // pred_region
          %489 = dma.done [#allocation7], 16
        $region84: #{tpu_custom_call.1} parent=75 // pred_fallthru
          _
        // Predicated region
        $region85: #{tpu_custom_call.1} parent=75 // pred_check
          %p490 = pneg %p206
        $region86: #{tpu_custom_call.1} parent=75 // pred_check_branch
          %492 = sbr.rel (%p490) target = $region88
        $region87: #{tpu_custom_call.1} parent=75 // pred_region
          %493 = dma.done [#allocation7], 16
        $region88: #{tpu_custom_call.1} parent=75 // pred_fallthru
          _
        // Predicated region
        $region89: #{tpu_custom_call.1} parent=75 // pred_check
          %p494 = pneg %p227
        $region90: #{tpu_custom_call.1} parent=75 // pred_check_branch
          %496 = sbr.rel (%p494) target = $region92
        $region91: #{tpu_custom_call.1} parent=75 // pred_region
          %497 = dma.done [#allocation10], 256
        $region92: #{tpu_custom_call.1} parent=75 // pred_fallthru
          _
        // Predicated region
        $region93: #{tpu_custom_call.1} parent=75 // pred_check
          %p498 = pneg %p248
        $region94: #{tpu_custom_call.1} parent=75 // pred_check_branch
          %500 = sbr.rel (%p498) target = $region96
        $region95: #{tpu_custom_call.1} parent=75 // pred_region
          %501 = dma.done [#allocation10], 16
        $region96: #{tpu_custom_call.1} parent=75 // pred_fallthru
          _
        %p502 = scmp.lt.s32.totalorder %s33, 1
        %s503 = scalar_select %p502, %s33, 1
        %s504 = smul.addr %s503, 8
        %s505 = scalar_lea.vmem %s0, %s504
        %p506 = pneg %p54
        %p507 = pneg %p51
        %s508 = sand.u32 %s67, 1
        %s509 = scalar_lea.sflag [#allocation4], %s508
        %s510 = sand.u32 %s67, 1
        %s511 = scalar_lea.vmem [#allocation3], %s510
        %p512 = pneg %p80
        %p513 = pneg %p77
        %p514 = pneg %p101
        %p515 = pneg %p98
        %p516 = pneg %p122
        %p517 = pneg %p119
        %p518 = pneg %p143
        %p519 = pneg %p140
        %p520 = pneg %p164
        %p521 = pneg %p161
        %p522 = pneg %p185
        %p523 = pneg %p182
        %p524 = pneg %p206
        %p525 = pneg %p203
        %p526 = pneg %p227
        %p527 = pneg %p224
        %p528 = pneg %p248
        %p529 = pneg %p245
        %p530 = pneg %p269
        %p531 = pneg %p266
        %p532 = pneg %p290
        %p533 = pneg %p287
        %p534 = pneg %p311
        %p535 = pneg %p308
        %p536 = pneg %p332
        %p537 = pneg %p329
        %p538 = pneg %p358
        %p539 = pneg %p355
        %s540 = sand.u32 %s345, 1
        %s541 = scalar_lea.sflag [#allocation5], %s540
        %s542 = sand.u32 %s345, 1
        %s543 = smul.addr %s542, 8
        %s544 = scalar_lea.vmem [#allocation12], %s543
        %p545 = scmp.lt.s32.totalorder %s33, 1
        %s546 = scalar_select %p545, %s33, 1
        %s547 = smul.addr %s546, 8
        %s548 = scalar_lea.vmem %s0, %s547
        %v550 = vld [vmem:[%s548] sm:$0xff]
        %v551 = vpack.c.bf16 %v550, %v550
        %v552 = vld [vmem:[%s2] sm:$0xf]
        %v553 = vld [vmem:[%s2 + $0x4] sm:$0xf]
        %v554 = vld [vmem:[%s2 + $0x8] sm:$0xf]
        %v555 = vld [vmem:[%s2 + $0xc] sm:$0xf]
        %v556 = vld [vmem:[%s3] sm:$0x1]
        %v558 = vlaneseq
        %v559 = vshrl.u32 %v558, 7
        %v560 = vsub.s32 0, %v559
        %v561 = vrot.slane %v556, %v560
        %v567 = vunpack.c.l.b16 %v552
        %v568 = vunpack.c.l.b16 %v553
        %v569 = vunpack.c.l.b16 %v554
        %v570 = vunpack.c.l.b16 %v555
        %v571 = vpack.c.b16 %v568, %v567
        %v572 = vpack.c.b16 %v570, %v569
        %vm575 = vcmask 261120
        %v577 = vsel %vm575, %v551, 0
        %579 = vmatprep.subr.bf16.mxu0 0
        %580 = vmatpush1.bf16.msra.mxu0 0
        %581 = vmatprep.subr.bf16.mxu0 0
        %582 = vmatpush1.bf16.msra.mxu0 0
        %583 = vmatprep.subr.bf16.mxu0 0
        %584 = vmatpush1.bf16.msra.mxu0 0
        %585 = vmatprep.subr.bf16.mxu0 0
        %586 = vmatpush1.bf16.msra.mxu0 0
        %587 = vmatprep.subr.bf16.mxu0 0
        %588 = vmatpush1.bf16.msra.mxu0 0
        %589 = vmatprep.subr.bf16.mxu0 0
        %590 = vmatpush1.bf16.msra.mxu0 0
        %591 = vmatprep.subr.bf16.mxu0 0
        %592 = vmatpush1.bf16.msra.mxu0 %v572
        %593 = vmatprep.subr.bf16.mxu0 0
        %594 = vmatpush1.bf16.msra.mxu0 %v571
        %595 = vmatprep.subr.bf16.mxu0 0
        %596 = vmatpush2.bf16.msra.mxu0 0
        %597 = vmatprep.subr.bf16.mxu0 0
        %598 = vmatpush2.bf16.msra.mxu0 0
        %599 = vmatprep.subr.bf16.mxu0 0
        %600 = vmatpush2.bf16.msra.mxu0 0
        %601 = vmatprep.subr.bf16.mxu0 0
        %602 = vmatpush2.bf16.msra.mxu0 0
        %603 = vmatprep.subr.bf16.mxu0 0
        %604 = vmatpush2.bf16.msra.mxu0 0
        %605 = vmatprep.subr.bf16.mxu0 0
        %606 = vmatpush2.bf16.msra.mxu0 0
        %607 = vmatprep.subr.bf16.mxu0 0
        %608 = vmatpush2.bf16.msra.mxu0 0
        %609 = vmatprep.subr.bf16.mxu0 0
        %610 = vmatpush2.bf16.msra.mxu0 0
        %611 = vmatprep.mubr.bf16.mxu0 0
        %612 = vmatmul.mubr.bf16.gmra.mxu0 %v577
        %v613 = vpop.f32.mrf.mxu0
        %v614 = vadd.f32 %v561, %v613
        %v615 = vpop.f32.mrf.mxu0
        %v616 = vpop.f32.mrf.mxu0
        %v617 = vpop.f32.mrf.mxu0
        %618 = vdwg.mxu0
        %v619 = vpack.c.bf16 %v614, %v614
        %v620 = vld [vmem:[%s481] sm:$0x1]
        %v622 = vlaneseq
        %v623 = vshrl.u32 %v622, 7
        %v624 = vsub.s32 0, %v623
        %v625 = vrot.slane %v620, %v624
        %628 = vrot.lane.b32.xlu0 %v619, 96
        %v629 = vpop.permute.xlu0 %628
        %vm630 = vcmask 64512
        %v632 = vsel %vm630, %v619, 0
        %v635 = vsel %vm630, %v629, 0
        %637 = vmatprep.subr.bf16.mxu0 0
        %638 = vmatpush1.bf16.xpose.msra.mxu0 0
        %639 = vmatprep.subr.bf16.mxu0 0
        %640 = vmatpush1.bf16.xpose.msra.mxu0 0
        %641 = vmatprep.subr.bf16.mxu0 0
        %642 = vmatpush1.bf16.xpose.msra.mxu0 0
        %643 = vmatprep.subr.bf16.mxu0 0
        %644 = vmatpush1.bf16.xpose.msra.mxu0 0
        %645 = vmatprep.subr.bf16.mxu0 0
        %646 = vmatpush1.bf16.xpose.msra.mxu0 0
        %647 = vmatprep.subr.bf16.mxu0 0
        %648 = vmatpush1.bf16.xpose.msra.mxu0 0
        %649 = vmatprep.subr.bf16.mxu0 0
        %650 = vmatpush1.bf16.xpose.msra.mxu0 0
        %651 = vmatprep.subr.bf16.mxu0 0
        %652 = vmatpush1.bf16.xpose.msra.mxu0 %v635
        %653 = vmatprep.subr.bf16.mxu0 0
        %654 = vmatpush2.bf16.xpose.msra.mxu0 0
        %655 = vmatprep.subr.bf16.mxu0 0
        %656 = vmatpush2.bf16.xpose.msra.mxu0 0
        %657 = vmatprep.subr.bf16.mxu0 0
        %658 = vmatpush2.bf16.xpose.msra.mxu0 0
        %659 = vmatprep.subr.bf16.mxu0 0
        %660 = vmatpush2.bf16.xpose.msra.mxu0 0
        %661 = vmatprep.subr.bf16.mxu0 0
        %662 = vmatpush2.bf16.xpose.msra.mxu0 0
        %663 = vmatprep.subr.bf16.mxu0 0
        %664 = vmatpush2.bf16.xpose.msra.mxu0 0
        %665 = vmatprep.subr.bf16.mxu0 0
        %666 = vmatpush2.bf16.xpose.msra.mxu0 0
        %667 = vmatprep.subr.bf16.mxu0 0
        %668 = vmatpush2.bf16.xpose.msra.mxu0 0
        %669 = vmatprep.mubr.bf16.mxu0 0
        %670 = vmatmul.mubr.bf16.gmra.mxu0 %v632
        %v671 = vpop.f32.mrf.mxu0
        %v672 = vadd.f32 %v625, %v671
        %v673 = vpop.f32.mrf.mxu0
        %v674 = vpop.f32.mrf.mxu0
        %v675 = vpop.f32.mrf.mxu0
        %676 = vdwg.mxu0
        %v677 = vsel %vm630, %v672, -inf
        %678 = vmax.xlane.f32.xlu0 %v677
        %v679 = vpop.xlane.xlu0 %678
        %v680 = vsub.f32 %v672, %v679
        %v681 = vmul.f32 %v680, 1.442695
        %v682 = vpow.pop %v681
        %v683 = vsel %vm630, %v682, 0.0
        %684 = vadd.xlane.f32.xlu0 %v683
        %v685 = vpop.xlane.xlu0 %684
        %v686 = vrcp.pop %v685
        %v687 = vmul.f32 1.0, %v686
        %v688 = vmul.f32 %v682, %v687
        %v689 = vpack.c.bf16 %v688, %v688
        %690 = vrot.lane.b32.xlu0 %v619, 64
        %v691 = vpop.permute.xlu0 %690
        %v693 = vsel %vm630, %v689, 0
        %vm695 = vcmask 1043456
        %v697 = vsel %vm695, %v691, 0
        %699 = vmatprep.subr.bf16.mxu0 0
        %700 = vmatpush1.bf16.msra.mxu0 0
        %701 = vmatprep.subr.bf16.mxu0 0
        %702 = vmatpush1.bf16.msra.mxu0 0
        %703 = vmatprep.subr.bf16.mxu0 0
        %704 = vmatpush1.bf16.msra.mxu0 0
        %705 = vmatprep.subr.bf16.mxu0 0
        %706 = vmatpush1.bf16.msra.mxu0 0
        %707 = vmatprep.subr.bf16.mxu0 0
        %708 = vmatpush1.bf16.msra.mxu0 0
        %709 = vmatprep.subr.bf16.mxu0 0
        %710 = vmatpush1.bf16.msra.mxu0 0
        %711 = vmatprep.subr.bf16.mxu0 0
        %712 = vmatpush1.bf16.msra.mxu0 0
        %713 = vmatprep.subr.bf16.mxu0 0
        %714 = vmatpush1.bf16.msra.mxu0 %v697
        %715 = vmatprep.subr.bf16.mxu0 0
        %716 = vmatpush2.bf16.msra.mxu0 0
        %717 = vmatprep.subr.bf16.mxu0 0
        %718 = vmatpush2.bf16.msra.mxu0 0
        %719 = vmatprep.subr.bf16.mxu0 0
        %720 = vmatpush2.bf16.msra.mxu0 0
        %721 = vmatprep.subr.bf16.mxu0 0
        %722 = vmatpush2.bf16.msra.mxu0 0
        %723 = vmatprep.subr.bf16.mxu0 0
        %724 = vmatpush2.bf16.msra.mxu0 0
        %725 = vmatprep.subr.bf16.mxu0 0
        %726 = vmatpush2.bf16.msra.mxu0 0
        %727 = vmatprep.subr.bf16.mxu0 0
        %728 = vmatpush2.bf16.msra.mxu0 0
        %729 = vmatprep.subr.bf16.mxu0 0
        %730 = vmatpush2.bf16.msra.mxu0 0
        %731 = vmatprep.mubr.bf16.mxu0 0
        %732 = vmatmul.mubr.bf16.gmra.mxu0 %v693
        %v733 = vpop.f32.mrf.mxu0
        %v734 = vadd.f32 0.0, %v733
        %v735 = vpop.f32.mrf.mxu0
        %v736 = vpop.f32.mrf.mxu0
        %v737 = vpop.f32.mrf.mxu0
        %738 = vdwg.mxu0
        %739 = vst.msk [vmem:[#allocation2] sm:$0xff] %vm630, %v734
        %740 = vrot.lane.b32.xlu0 %v619, 120
        %v741 = vpop.permute.xlu0 %740
        %742 = vrot.lane.b32.xlu0 %v619, 88
        %v743 = vpop.permute.xlu0 %742
        %v745 = vsel %vm630, %v741, 0
        %v748 = vsel %vm630, %v743, 0
        %750 = vmatprep.subr.bf16.mxu0 0
        %751 = vmatpush1.bf16.xpose.msra.mxu0 0
        %752 = vmatprep.subr.bf16.mxu0 0
        %753 = vmatpush1.bf16.xpose.msra.mxu0 0
        %754 = vmatprep.subr.bf16.mxu0 0
        %755 = vmatpush1.bf16.xpose.msra.mxu0 0
        %756 = vmatprep.subr.bf16.mxu0 0
        %757 = vmatpush1.bf16.xpose.msra.mxu0 0
        %758 = vmatprep.subr.bf16.mxu0 0
        %759 = vmatpush1.bf16.xpose.msra.mxu0 0
        %760 = vmatprep.subr.bf16.mxu0 0
        %761 = vmatpush1.bf16.xpose.msra.mxu0 0
        %762 = vmatprep.subr.bf16.mxu0 0
        %763 = vmatpush1.bf16.xpose.msra.mxu0 0
        %764 = vmatprep.subr.bf16.mxu0 0
        %765 = vmatpush1.bf16.xpose.msra.mxu0 %v748
        %766 = vmatprep.subr.bf16.mxu0 0
        %767 = vmatpush2.bf16.xpose.msra.mxu0 0
        %768 = vmatprep.subr.bf16.mxu0 0
        %769 = vmatpush2.bf16.xpose.msra.mxu0 0
        %770 = vmatprep.subr.bf16.mxu0 0
        %771 = vmatpush2.bf16.xpose.msra.mxu0 0
        %772 = vmatprep.subr.bf16.mxu0 0
        %773 = vmatpush2.bf16.xpose.msra.mxu0 0
        %774 = vmatprep.subr.bf16.mxu0 0
        %775 = vmatpush2.bf16.xpose.msra.mxu0 0
        %776 = vmatprep.subr.bf16.mxu0 0
        %777 = vmatpush2.bf16.xpose.msra.mxu0 0
        %778 = vmatprep.subr.bf16.mxu0 0
        %779 = vmatpush2.bf16.xpose.msra.mxu0 0
        %780 = vmatprep.subr.bf16.mxu0 0
        %781 = vmatpush2.bf16.xpose.msra.mxu0 0
        %782 = vmatprep.mubr.bf16.mxu0 0
        %783 = vmatmul.mubr.bf16.gmra.mxu0 %v745
        %v784 = vpop.f32.mrf.mxu0
        %v785 = vadd.f32 %v625, %v784
        %v786 = vpop.f32.mrf.mxu0
        %v787 = vpop.f32.mrf.mxu0
        %v788 = vpop.f32.mrf.mxu0
        %789 = vdwg.mxu0
        %v790 = vsel %vm630, %v785, -inf
        %791 = vmax.xlane.f32.xlu0 %v790
        %v792 = vpop.xlane.xlu0 %791
        %v793 = vsub.f32 %v785, %v792
        %v794 = vmul.f32 %v793, 1.442695
        %v795 = vpow.pop %v794
        %v796 = vsel %vm630, %v795, 0.0
        %797 = vadd.xlane.f32.xlu0 %v796
        %v798 = vpop.xlane.xlu0 %797
        %v799 = vrcp.pop %v798
        %v800 = vmul.f32 1.0, %v799
        %v801 = vmul.f32 %v795, %v800
        %v802 = vpack.c.bf16 %v801, %v801
        %803 = vrot.lane.b32.xlu0 %v619, 56
        %v804 = vpop.permute.xlu0 %803
        %v806 = vsel %vm630, %v802, 0
        %v809 = vsel %vm695, %v804, 0
        %811 = vmatprep.subr.bf16.mxu0 0
        %812 = vmatpush1.bf16.msra.mxu0 0
        %813 = vmatprep.subr.bf16.mxu0 0
        %814 = vmatpush1.bf16.msra.mxu0 0
        %815 = vmatprep.subr.bf16.mxu0 0
        %816 = vmatpush1.bf16.msra.mxu0 0
        %817 = vmatprep.subr.bf16.mxu0 0
        %818 = vmatpush1.bf16.msra.mxu0 0
        %819 = vmatprep.subr.bf16.mxu0 0
        %820 = vmatpush1.bf16.msra.mxu0 0
        %821 = vmatprep.subr.bf16.mxu0 0
        %822 = vmatpush1.bf16.msra.mxu0 0
        %823 = vmatprep.subr.bf16.mxu0 0
        %824 = vmatpush1.bf16.msra.mxu0 0
        %825 = vmatprep.subr.bf16.mxu0 0
        %826 = vmatpush1.bf16.msra.mxu0 %v809
        %827 = vmatprep.subr.bf16.mxu0 0
        %828 = vmatpush2.bf16.msra.mxu0 0
        %829 = vmatprep.subr.bf16.mxu0 0
        %830 = vmatpush2.bf16.msra.mxu0 0
        %831 = vmatprep.subr.bf16.mxu0 0
        %832 = vmatpush2.bf16.msra.mxu0 0
        %833 = vmatprep.subr.bf16.mxu0 0
        %834 = vmatpush2.bf16.msra.mxu0 0
        %835 = vmatprep.subr.bf16.mxu0 0
        %836 = vmatpush2.bf16.msra.mxu0 0
        %837 = vmatprep.subr.bf16.mxu0 0
        %838 = vmatpush2.bf16.msra.mxu0 0
        %839 = vmatprep.subr.bf16.mxu0 0
        %840 = vmatpush2.bf16.msra.mxu0 0
        %841 = vmatprep.subr.bf16.mxu0 0
        %842 = vmatpush2.bf16.msra.mxu0 0
        %843 = vmatprep.mubr.bf16.mxu0 0
        %844 = vmatmul.mubr.bf16.gmra.mxu0 %v806
        %v845 = vpop.f32.mrf.mxu0
        %v846 = vadd.f32 0.0, %v845
        %v847 = vpop.f32.mrf.mxu0
        %v848 = vpop.f32.mrf.mxu0
        %v849 = vpop.f32.mrf.mxu0
        %850 = vdwg.mxu0
        %852 = vrot.lane.b32.xlu0 %v846, 8
        %v853 = vpop.permute.xlu0 %852
        %vm855 = vcmask 130112
        %856 = vst.msk [vmem:[#allocation2] sm:$0xff] %vm855, %v853
        %857 = vrot.lane.b32.xlu0 %v619, 112
        %v858 = vpop.permute.xlu0 %857
        %859 = vrot.lane.b32.xlu0 %v619, 80
        %v860 = vpop.permute.xlu0 %859
        %v862 = vsel %vm630, %v858, 0
        %v865 = vsel %vm630, %v860, 0
        %867 = vmatprep.subr.bf16.mxu0 0
        %868 = vmatpush1.bf16.xpose.msra.mxu0 0
        %869 = vmatprep.subr.bf16.mxu0 0
        %870 = vmatpush1.bf16.xpose.msra.mxu0 0
        %871 = vmatprep.subr.bf16.mxu0 0
        %872 = vmatpush1.bf16.xpose.msra.mxu0 0
        %873 = vmatprep.subr.bf16.mxu0 0
        %874 = vmatpush1.bf16.xpose.msra.mxu0 0
        %875 = vmatprep.subr.bf16.mxu0 0
        %876 = vmatpush1.bf16.xpose.msra.mxu0 0
        %877 = vmatprep.subr.bf16.mxu0 0
        %878 = vmatpush1.bf16.xpose.msra.mxu0 0
        %879 = vmatprep.subr.bf16.mxu0 0
        %880 = vmatpush1.bf16.xpose.msra.mxu0 0
        %881 = vmatprep.subr.bf16.mxu0 0
        %882 = vmatpush1.bf16.xpose.msra.mxu0 %v865
        %883 = vmatprep.subr.bf16.mxu0 0
        %884 = vmatpush2.bf16.xpose.msra.mxu0 0
        %885 = vmatprep.subr.bf16.mxu0 0
        %886 = vmatpush2.bf16.xpose.msra.mxu0 0
        %887 = vmatprep.subr.bf16.mxu0 0
        %888 = vmatpush2.bf16.xpose.msra.mxu0 0
        %889 = vmatprep.subr.bf16.mxu0 0
        %890 = vmatpush2.bf16.xpose.msra.mxu0 0
        %891 = vmatprep.subr.bf16.mxu0 0
        %892 = vmatpush2.bf16.xpose.msra.mxu0 0
        %893 = vmatprep.subr.bf16.mxu0 0
        %894 = vmatpush2.bf16.xpose.msra.mxu0 0
        %895 = vmatprep.subr.bf16.mxu0 0
        %896 = vmatpush2.bf16.xpose.msra.mxu0 0
        %897 = vmatprep.subr.bf16.mxu0 0
        %898 = vmatpush2.bf16.xpose.msra.mxu0 0
        %899 = vmatprep.mubr.bf16.mxu0 0
        %900 = vmatmul.mubr.bf16.gmra.mxu0 %v862
        %v901 = vpop.f32.mrf.mxu0
        %v902 = vadd.f32 %v625, %v901
        %v903 = vpop.f32.mrf.mxu0
        %v904 = vpop.f32.mrf.mxu0
        %v905 = vpop.f32.mrf.mxu0
        %906 = vdwg.mxu0
        %v907 = vsel %vm630, %v902, -inf
        %908 = vmax.xlane.f32.xlu0 %v907
        %v909 = vpop.xlane.xlu0 %908
        %v910 = vsub.f32 %v902, %v909
        %v911 = vmul.f32 %v910, 1.442695
        %v912 = vpow.pop %v911
        %v913 = vsel %vm630, %v912, 0.0
        %914 = vadd.xlane.f32.xlu0 %v913
        %v915 = vpop.xlane.xlu0 %914
        %v916 = vrcp.pop %v915
        %v917 = vmul.f32 1.0, %v916
        %v918 = vmul.f32 %v912, %v917
        %v919 = vpack.c.bf16 %v918, %v918
        %920 = vrot.lane.b32.xlu0 %v619, 48
        %v921 = vpop.permute.xlu0 %920
        %v923 = vsel %vm630, %v919, 0
        %v926 = vsel %vm695, %v921, 0
        %928 = vmatprep.subr.bf16.mxu0 0
        %929 = vmatpush1.bf16.msra.mxu0 0
        %930 = vmatprep.subr.bf16.mxu0 0
        %931 = vmatpush1.bf16.msra.mxu0 0
        %932 = vmatprep.subr.bf16.mxu0 0
        %933 = vmatpush1.bf16.msra.mxu0 0
        %934 = vmatprep.subr.bf16.mxu0 0
        %935 = vmatpush1.bf16.msra.mxu0 0
        %936 = vmatprep.subr.bf16.mxu0 0
        %937 = vmatpush1.bf16.msra.mxu0 0
        %938 = vmatprep.subr.bf16.mxu0 0
        %939 = vmatpush1.bf16.msra.mxu0 0
        %940 = vmatprep.subr.bf16.mxu0 0
        %941 = vmatpush1.bf16.msra.mxu0 0
        %942 = vmatprep.subr.bf16.mxu0 0
        %943 = vmatpush1.bf16.msra.mxu0 %v926
        %944 = vmatprep.subr.bf16.mxu0 0
        %945 = vmatpush2.bf16.msra.mxu0 0
        %946 = vmatprep.subr.bf16.mxu0 0
        %947 = vmatpush2.bf16.msra.mxu0 0
        %948 = vmatprep.subr.bf16.mxu0 0
        %949 = vmatpush2.bf16.msra.mxu0 0
        %950 = vmatprep.subr.bf16.mxu0 0
        %951 = vmatpush2.bf16.msra.mxu0 0
        %952 = vmatprep.subr.bf16.mxu0 0
        %953 = vmatpush2.bf16.msra.mxu0 0
        %954 = vmatprep.subr.bf16.mxu0 0
        %955 = vmatpush2.bf16.msra.mxu0 0
        %956 = vmatprep.subr.bf16.mxu0 0
        %957 = vmatpush2.bf16.msra.mxu0 0
        %958 = vmatprep.subr.bf16.mxu0 0
        %959 = vmatpush2.bf16.msra.mxu0 0
        %960 = vmatprep.mubr.bf16.mxu0 0
        %961 = vmatmul.mubr.bf16.gmra.mxu0 %v923
        %v962 = vpop.f32.mrf.mxu0
        %v963 = vadd.f32 0.0, %v962
        %v964 = vpop.f32.mrf.mxu0
        %v965 = vpop.f32.mrf.mxu0
        %v966 = vpop.f32.mrf.mxu0
        %967 = vdwg.mxu0
        %969 = vrot.lane.b32.xlu0 %v963, 16
        %v970 = vpop.permute.xlu0 %969
        %vm972 = vcmask 195712
        %973 = vst.msk [vmem:[#allocation2] sm:$0xff] %vm972, %v970
        %974 = vrot.lane.b32.xlu0 %v619, 104
        %v975 = vpop.permute.xlu0 %974
        %976 = vrot.lane.b32.xlu0 %v619, 72
        %v977 = vpop.permute.xlu0 %976
        %v979 = vsel %vm630, %v975, 0
        %v982 = vsel %vm630, %v977, 0
        %984 = vmatprep.subr.bf16.mxu0 0
        %985 = vmatpush1.bf16.xpose.msra.mxu0 0
        %986 = vmatprep.subr.bf16.mxu0 0
        %987 = vmatpush1.bf16.xpose.msra.mxu0 0
        %988 = vmatprep.subr.bf16.mxu0 0
        %989 = vmatpush1.bf16.xpose.msra.mxu0 0
        %990 = vmatprep.subr.bf16.mxu0 0
        %991 = vmatpush1.bf16.xpose.msra.mxu0 0
        %992 = vmatprep.subr.bf16.mxu0 0
        %993 = vmatpush1.bf16.xpose.msra.mxu0 0
        %994 = vmatprep.subr.bf16.mxu0 0
        %995 = vmatpush1.bf16.xpose.msra.mxu0 0
        %996 = vmatprep.subr.bf16.mxu0 0
        %997 = vmatpush1.bf16.xpose.msra.mxu0 0
        %998 = vmatprep.subr.bf16.mxu0 0
        %999 = vmatpush1.bf16.xpose.msra.mxu0 %v982
        %1000 = vmatprep.subr.bf16.mxu0 0
        %1001 = vmatpush2.bf16.xpose.msra.mxu0 0
        %1002 = vmatprep.subr.bf16.mxu0 0
        %1003 = vmatpush2.bf16.xpose.msra.mxu0 0
        %1004 = vmatprep.subr.bf16.mxu0 0
        %1005 = vmatpush2.bf16.xpose.msra.mxu0 0
        %1006 = vmatprep.subr.bf16.mxu0 0
        %1007 = vmatpush2.bf16.xpose.msra.mxu0 0
        %1008 = vmatprep.subr.bf16.mxu0 0
        %1009 = vmatpush2.bf16.xpose.msra.mxu0 0
        %1010 = vmatprep.subr.bf16.mxu0 0
        %1011 = vmatpush2.bf16.xpose.msra.mxu0 0
        %1012 = vmatprep.subr.bf16.mxu0 0
        %1013 = vmatpush2.bf16.xpose.msra.mxu0 0
        %1014 = vmatprep.subr.bf16.mxu0 0
        %1015 = vmatpush2.bf16.xpose.msra.mxu0 0
        %1016 = vmatprep.mubr.bf16.mxu0 0
        %1017 = vmatmul.mubr.bf16.gmra.mxu0 %v979
        %v1018 = vpop.f32.mrf.mxu0
        %v1019 = vadd.f32 %v625, %v1018
        %v1020 = vpop.f32.mrf.mxu0
        %v1021 = vpop.f32.mrf.mxu0
        %v1022 = vpop.f32.mrf.mxu0
        %1023 = vdwg.mxu0
        %v1024 = vsel %vm630, %v1019, -inf
        %1025 = vmax.xlane.f32.xlu0 %v1024
        %v1026 = vpop.xlane.xlu0 %1025
        %v1027 = vsub.f32 %v1019, %v1026
        %v1028 = vmul.f32 %v1027, 1.442695
        %v1029 = vpow.pop %v1028
        %v1030 = vsel %vm630, %v1029, 0.0
        %1031 = vadd.xlane.f32.xlu0 %v1030
        %v1032 = vpop.xlane.xlu0 %1031
        %v1033 = vrcp.pop %v1032
        %v1034 = vmul.f32 1.0, %v1033
        %v1035 = vmul.f32 %v1029, %v1034
        %v1036 = vpack.c.bf16 %v1035, %v1035
        %1037 = vrot.lane.b32.xlu0 %v619, 40
        %v1038 = vpop.permute.xlu0 %1037
        %v1040 = vsel %vm630, %v1036, 0
        %v1043 = vsel %vm695, %v1038, 0
        %1045 = vmatprep.subr.bf16.mxu0 0
        %1046 = vmatpush1.bf16.msra.mxu0 0
        %1047 = vmatprep.subr.bf16.mxu0 0
        %1048 = vmatpush1.bf16.msra.mxu0 0
        %1049 = vmatprep.subr.bf16.mxu0 0
        %1050 = vmatpush1.bf16.msra.mxu0 0
        %1051 = vmatprep.subr.bf16.mxu0 0
        %1052 = vmatpush1.bf16.msra.mxu0 0
        %1053 = vmatprep.subr.bf16.mxu0 0
        %1054 = vmatpush1.bf16.msra.mxu0 0
        %1055 = vmatprep.subr.bf16.mxu0 0
        %1056 = vmatpush1.bf16.msra.mxu0 0
        %1057 = vmatprep.subr.bf16.mxu0 0
        %1058 = vmatpush1.bf16.msra.mxu0 0
        %1059 = vmatprep.subr.bf16.mxu0 0
        %1060 = vmatpush1.bf16.msra.mxu0 %v1043
        %1061 = vmatprep.subr.bf16.mxu0 0
        %1062 = vmatpush2.bf16.msra.mxu0 0
        %1063 = vmatprep.subr.bf16.mxu0 0
        %1064 = vmatpush2.bf16.msra.mxu0 0
        %1065 = vmatprep.subr.bf16.mxu0 0
        %1066 = vmatpush2.bf16.msra.mxu0 0
        %1067 = vmatprep.subr.bf16.mxu0 0
        %1068 = vmatpush2.bf16.msra.mxu0 0
        %1069 = vmatprep.subr.bf16.mxu0 0
        %1070 = vmatpush2.bf16.msra.mxu0 0
        %1071 = vmatprep.subr.bf16.mxu0 0
        %1072 = vmatpush2.bf16.msra.mxu0 0
        %1073 = vmatprep.subr.bf16.mxu0 0
        %1074 = vmatpush2.bf16.msra.mxu0 0
        %1075 = vmatprep.subr.bf16.mxu0 0
        %1076 = vmatpush2.bf16.msra.mxu0 0
        %1077 = vmatprep.mubr.bf16.mxu0 0
        %1078 = vmatmul.mubr.bf16.gmra.mxu0 %v1040
        %v1079 = vpop.f32.mrf.mxu0
        %v1080 = vadd.f32 0.0, %v1079
        %v1081 = vpop.f32.mrf.mxu0
        %v1082 = vpop.f32.mrf.mxu0
        %v1083 = vpop.f32.mrf.mxu0
        %1084 = vdwg.mxu0
        %1086 = vrot.lane.b32.xlu0 %v1080, 24
        %v1087 = vpop.permute.xlu0 %1086
        %vm1089 = vcmask 261312
        %1090 = vst.msk [vmem:[#allocation2] sm:$0xff] %vm1089, %v1087
        %v1091 = vld [vmem:[#allocation2] sm:$0xff]
        %v1092 = vpack.c.bf16 %v1091, %v1091
        %v1093 = vld [vmem:[%s4] sm:$0xf]
        %v1094 = vld [vmem:[%s4 + $0x4] sm:$0xf]
        %v1095 = vld [vmem:[%s4 + $0x8] sm:$0xf]
        %v1096 = vld [vmem:[%s4 + $0xc] sm:$0xf]
        %v1097 = vld [vmem:[%s5] sm:$0x1]
        %v1099 = vlaneseq
        %v1100 = vshrl.u32 %v1099, 7
        %v1101 = vsub.s32 0, %v1100
        %v1102 = vrot.slane %v1097, %v1101
        %v1108 = vunpack.c.l.b16 %v1093
        %v1109 = vunpack.c.l.b16 %v1094
        %v1110 = vunpack.c.l.b16 %v1095
        %v1111 = vunpack.c.l.b16 %v1096
        %v1112 = vpack.c.b16 %v1109, %v1108
        %v1113 = vpack.c.b16 %v1111, %v1110
        %v1117 = vsel %vm575, %v1092, 0
        %1119 = vmatprep.subr.bf16.mxu0 0
        %1120 = vmatpush1.bf16.msra.mxu0 0
        %1121 = vmatprep.subr.bf16.mxu0 0
        %1122 = vmatpush1.bf16.msra.mxu0 0
        %1123 = vmatprep.subr.bf16.mxu0 0
        %1124 = vmatpush1.bf16.msra.mxu0 0
        %1125 = vmatprep.subr.bf16.mxu0 0
        %1126 = vmatpush1.bf16.msra.mxu0 0
        %1127 = vmatprep.subr.bf16.mxu0 0
        %1128 = vmatpush1.bf16.msra.mxu0 0
        %1129 = vmatprep.subr.bf16.mxu0 0
        %1130 = vmatpush1.bf16.msra.mxu0 0
        %1131 = vmatprep.subr.bf16.mxu0 0
        %1132 = vmatpush1.bf16.msra.mxu0 %v1113
        %1133 = vmatprep.subr.bf16.mxu0 0
        %1134 = vmatpush1.bf16.msra.mxu0 %v1112
        %1135 = vmatprep.subr.bf16.mxu0 0
        %1136 = vmatpush2.bf16.msra.mxu0 0
        %1137 = vmatprep.subr.bf16.mxu0 0
        %1138 = vmatpush2.bf16.msra.mxu0 0
        %1139 = vmatprep.subr.bf16.mxu0 0
        %1140 = vmatpush2.bf16.msra.mxu0 0
        %1141 = vmatprep.subr.bf16.mxu0 0
        %1142 = vmatpush2.bf16.msra.mxu0 0
        %1143 = vmatprep.subr.bf16.mxu0 0
        %1144 = vmatpush2.bf16.msra.mxu0 0
        %1145 = vmatprep.subr.bf16.mxu0 0
        %1146 = vmatpush2.bf16.msra.mxu0 0
        %1147 = vmatprep.subr.bf16.mxu0 0
        %1148 = vmatpush2.bf16.msra.mxu0 0
        %1149 = vmatprep.subr.bf16.mxu0 0
        %1150 = vmatpush2.bf16.msra.mxu0 0
        %1151 = vmatprep.mubr.bf16.mxu0 0
        %1152 = vmatmul.mubr.bf16.gmra.mxu0 %v1117
        %v1153 = vpop.f32.mrf.mxu0
        %v1154 = vadd.f32 %v1102, %v1153
        %v1155 = vpop.f32.mrf.mxu0
        %v1156 = vpop.f32.mrf.mxu0
        %v1157 = vpop.f32.mrf.mxu0
        %1158 = vdwg.mxu0
        %v1159 = vadd.f32 %v550, %v1154
        %v1160 = vld [vmem:[#allocation6] sm:$0x1]
        %v1161 = vld [vmem:[#allocation8] sm:$0x1]
        %v1162 = vsel %vm575, %v1159, 0.0
        %1163 = vadd.xlane.f32.xlu0 %v1162
        %v1164 = vpop.xlane.xlu0 %1163
        %v1165 = vmul.f32 %v1159, %v1159
        %v1166 = vsel %vm575, %v1165, 0.0
        %1167 = vadd.xlane.f32.xlu0 %v1166
        %v1168 = vpop.xlane.xlu0 %1167
        %v1169 = vmul.f32 %v1164, 0.03125
        %v1170 = vmul.f32 %v1168, 0.03125
        %v1171 = vmul.f32 %v1169, %v1169
        %v1172 = vsub.f32 %v1170, %v1171
        %v1173 = vsub.f32 %v1159, %v1169
        %v1174 = vadd.f32 %v1172, 1e-05
        %v1175 = vrsqrt.pop %v1174
        %v1176 = vmul.f32 %v1173, %v1175
        %v1178 = vlaneseq
        %v1179 = vshrl.u32 %v1178, 7
        %v1180 = vsub.s32 0, %v1179
        %v1181 = vrot.slane %v1160, %v1180
        %v1183 = vmul.f32 %v1176, %v1181
        %v1185 = vlaneseq
        %v1186 = vshrl.u32 %v1185, 7
        %v1187 = vsub.s32 0, %v1186
        %v1188 = vrot.slane %v1161, %v1187
        %v1190 = vadd.f32 %v1183, %v1188
        %v1191 = vpack.c.bf16 %v1190, %v1190
        %v1192 = vld [vmem:[#allocation9] sm:$0xf]
        %v1193 = vld [vmem:[#allocation9 + $0x4] sm:$0xf]
        %v1194 = vld [vmem:[#allocation9 + $0x8] sm:$0xf]
        %v1195 = vld [vmem:[#allocation9 + $0xc] sm:$0xf]
        %v1196 = vld [vmem:[#allocation11] sm:$0x1]
        %v1198 = vlaneseq
        %v1199 = vshrl.u32 %v1198, 7
        %v1200 = vsub.s32 0, %v1199
        %v1201 = vrot.slane %v1196, %v1200
        %v1207 = vunpack.c.l.b16 %v1192
        %v1208 = vunpack.c.l.b16 %v1193
        %v1209 = vunpack.c.l.b16 %v1194
        %v1210 = vunpack.c.l.b16 %v1195
        %v1211 = vpack.c.b16 %v1208, %v1207
        %v1212 = vpack.c.b16 %v1210, %v1209
        %v1216 = vsel %vm575, %v1191, 0
        %1218 = vmatprep.subr.bf16.mxu0 0
        %1219 = vmatpush1.bf16.msra.mxu0 0
        %1220 = vmatprep.subr.bf16.mxu0 0
        %1221 = vmatpush1.bf16.msra.mxu0 0
        %1222 = vmatprep.subr.bf16.mxu0 0
        %1223 = vmatpush1.bf16.msra.mxu0 0
        %1224 = vmatprep.subr.bf16.mxu0 0
        %1225 = vmatpush1.bf16.msra.mxu0 0
        %1226 = vmatprep.subr.bf16.mxu0 0
        %1227 = vmatpush1.bf16.msra.mxu0 0
        %1228 = vmatprep.subr.bf16.mxu0 0
        %1229 = vmatpush1.bf16.msra.mxu0 0
        %1230 = vmatprep.subr.bf16.mxu0 0
        %1231 = vmatpush1.bf16.msra.mxu0 %v1212
        %1232 = vmatprep.subr.bf16.mxu0 0
        %1233 = vmatpush1.bf16.msra.mxu0 %v1211
        %1234 = vmatprep.subr.bf16.mxu0 0
        %1235 = vmatpush2.bf16.msra.mxu0 0
        %1236 = vmatprep.subr.bf16.mxu0 0
        %1237 = vmatpush2.bf16.msra.mxu0 0
        %1238 = vmatprep.subr.bf16.mxu0 0
        %1239 = vmatpush2.bf16.msra.mxu0 0
        %1240 = vmatprep.subr.bf16.mxu0 0
        %1241 = vmatpush2.bf16.msra.mxu0 0
        %1242 = vmatprep.subr.bf16.mxu0 0
        %1243 = vmatpush2.bf16.msra.mxu0 0
        %1244 = vmatprep.subr.bf16.mxu0 0
        %1245 = vmatpush2.bf16.msra.mxu0 0
        %1246 = vmatprep.subr.bf16.mxu0 0
        %1247 = vmatpush2.bf16.msra.mxu0 0
        %1248 = vmatprep.subr.bf16.mxu0 0
        %1249 = vmatpush2.bf16.msra.mxu0 0
        %1250 = vmatprep.mubr.bf16.mxu0 0
        %1251 = vmatmul.mubr.bf16.gmra.mxu0 %v1216
        %v1252 = vpop.f32.mrf.mxu0
        %v1253 = vadd.f32 %v1201, %v1252
        %v1254 = vpop.f32.mrf.mxu0
        %v1255 = vpop.f32.mrf.mxu0
        %v1256 = vpop.f32.mrf.mxu0
        %1257 = vdwg.mxu0
        %v1258 = vmax.f32 %v1253, 0.0
        %v1259 = vpack.c.bf16 %v1258, %v1258
        %v1260 = vld [vmem:[%s10] sm:$0xf]
        %v1261 = vld [vmem:[%s10 + $0x4] sm:$0xf]
        %v1262 = vld [vmem:[%s10 + $0x8] sm:$0xf]
        %v1263 = vld [vmem:[%s10 + $0xc] sm:$0xf]
        %v1264 = vld [vmem:[%s10 + $0x10] sm:$0xf]
        %v1265 = vld [vmem:[%s10 + $0x14] sm:$0xf]
        %v1266 = vld [vmem:[%s10 + $0x18] sm:$0xf]
        %v1267 = vld [vmem:[%s10 + $0x1c] sm:$0xf]
        %v1268 = vld [vmem:[%s11] sm:$0x1]
        %v1270 = vlaneseq
        %v1271 = vshrl.u32 %v1270, 7
        %v1272 = vsub.s32 0, %v1271
        %v1273 = vrot.slane %v1268, %v1272
        %v1283 = vunpack.c.l.b16 %v1260
        %v1284 = vunpack.c.l.b16 %v1261
        %v1285 = vunpack.c.l.b16 %v1262
        %v1286 = vunpack.c.l.b16 %v1263
        %v1287 = vunpack.c.l.b16 %v1264
        %v1288 = vunpack.c.l.b16 %v1265
        %v1289 = vunpack.c.l.b16 %v1266
        %v1290 = vunpack.c.l.b16 %v1267
        %v1291 = vpack.c.b16 %v1284, %v1283
        %v1292 = vpack.c.b16 %v1286, %v1285
        %v1293 = vpack.c.b16 %v1288, %v1287
        %v1294 = vpack.c.b16 %v1290, %v1289
        %vm1299 = vcmask 523264
        %v1301 = vsel %vm1299, %v1259, 0
        %1303 = vmatprep.subr.bf16.mxu0 0
        %1304 = vmatpush1.bf16.msra.mxu0 0
        %1305 = vmatprep.subr.bf16.mxu0 0
        %1306 = vmatpush1.bf16.msra.mxu0 0
        %1307 = vmatprep.subr.bf16.mxu0 0
        %1308 = vmatpush1.bf16.msra.mxu0 0
        %1309 = vmatprep.subr.bf16.mxu0 0
        %1310 = vmatpush1.bf16.msra.mxu0 0
        %1311 = vmatprep.subr.bf16.mxu0 0
        %1312 = vmatpush1.bf16.msra.mxu0 %v1294
        %1313 = vmatprep.subr.bf16.mxu0 0
        %1314 = vmatpush1.bf16.msra.mxu0 %v1293
        %1315 = vmatprep.subr.bf16.mxu0 0
        %1316 = vmatpush1.bf16.msra.mxu0 %v1292
        %1317 = vmatprep.subr.bf16.mxu0 0
        %1318 = vmatpush1.bf16.msra.mxu0 %v1291
        %1319 = vmatprep.subr.bf16.mxu0 0
        %1320 = vmatpush2.bf16.msra.mxu0 0
        %1321 = vmatprep.subr.bf16.mxu0 0
        %1322 = vmatpush2.bf16.msra.mxu0 0
        %1323 = vmatprep.subr.bf16.mxu0 0
        %1324 = vmatpush2.bf16.msra.mxu0 0
        %1325 = vmatprep.subr.bf16.mxu0 0
        %1326 = vmatpush2.bf16.msra.mxu0 0
        %1327 = vmatprep.subr.bf16.mxu0 0
        %1328 = vmatpush2.bf16.msra.mxu0 0
        %1329 = vmatprep.subr.bf16.mxu0 0
        %1330 = vmatpush2.bf16.msra.mxu0 0
        %1331 = vmatprep.subr.bf16.mxu0 0
        %1332 = vmatpush2.bf16.msra.mxu0 0
        %1333 = vmatprep.subr.bf16.mxu0 0
        %1334 = vmatpush2.bf16.msra.mxu0 0
        %1335 = vmatprep.mubr.bf16.mxu0 0
        %1336 = vmatmul.mubr.bf16.gmra.mxu0 %v1301
        %v1337 = vpop.f32.mrf.mxu0
        %v1338 = vadd.f32 %v1273, %v1337
        %v1339 = vpop.f32.mrf.mxu0
        %v1340 = vpop.f32.mrf.mxu0
        %v1341 = vpop.f32.mrf.mxu0
        %1342 = vdwg.mxu0
        %v1343 = vadd.f32 %v1190, %v1338
        %v1344 = vld [vmem:[%s12] sm:$0x1]
        %v1345 = vld [vmem:[%s13] sm:$0x1]
        %v1346 = vsel %vm575, %v1343, 0.0
        %1347 = vadd.xlane.f32.xlu0 %v1346
        %v1348 = vpop.xlane.xlu0 %1347
        %v1349 = vmul.f32 %v1343, %v1343
        %v1350 = vsel %vm575, %v1349, 0.0
        %1351 = vadd.xlane.f32.xlu0 %v1350
        %v1352 = vpop.xlane.xlu0 %1351
        %v1353 = vmul.f32 %v1348, 0.03125
        %v1354 = vmul.f32 %v1352, 0.03125
        %v1355 = vmul.f32 %v1353, %v1353
        %v1356 = vsub.f32 %v1354, %v1355
        %v1357 = vsub.f32 %v1343, %v1353
        %v1358 = vadd.f32 %v1356, 1e-05
        %v1359 = vrsqrt.pop %v1358
        %v1360 = vmul.f32 %v1357, %v1359
        %v1362 = vlaneseq
        %v1363 = vshrl.u32 %v1362, 7
        %v1364 = vsub.s32 0, %v1363
        %v1365 = vrot.slane %v1344, %v1364
        %v1367 = vmul.f32 %v1360, %v1365
        %v1369 = vlaneseq
        %v1370 = vshrl.u32 %v1369, 7
        %v1371 = vsub.s32 0, %v1370
        %v1372 = vrot.slane %v1345, %v1371
        %v1374 = vadd.f32 %v1367, %v1372
        %1375 = vst.msk [vmem:[%s544] sm:$0xff] %vm575, %v1374
        %s1376 = sand.u32 %s345, 1
        %s1377 = scalar_lea.sflag [#allocation5], %s1376
        %s1378 = sand.u32 %s345, 1
        %s1379 = smul.addr %s1378, 8
        %s1380 = scalar_lea.vmem [#allocation12], %s1379
        // Predicated region
        $region97: #{tpu_custom_call.1} parent=75 // pred_check
          %p1381 = pneg %p355
        $region98: #{tpu_custom_call.1} parent=75 // pred_check_branch
          %1383 = sbr.rel (%p1381) target = $region100
        $region99: #{tpu_custom_call.1} parent=75 // pred_region
          %s1385 = ssub.s32 128, 128
          %1386 = vsyncadd %s1377, %s1385
          %s1387 = smul.addr %s33, 128
          %s1388 = scalar_lea.hbm %s14, %s1387
          %s1390 = sshll.u32 %s1380, 4
          %s1391 = int_to_ptr.vmem [resolvable:$true] %s1390
          %1393 = dma.vmem_to_hbm [thread:$0]  %s1391, 128, %s1388, %s1377
        $region100: #{tpu_custom_call.1} parent=75 // pred_fallthru
          _
      $region76: #{tpu_custom_call.1} parent=5 // pred_fallthru
        _
      %p1394 = scmp.le.s32.totalorder 2, %s28
      // Predicated region
      $region101: #{tpu_custom_call.1} parent=5 // pred_check
        %p1395 = pneg %p1394
      $region102: #{tpu_custom_call.1} parent=5 // pred_check_branch
        %1397 = sbr.rel (%p1395) target = $region104
      $region103: #{tpu_custom_call.1} parent=5 // pred_region
        %s1398 = ssub.s32 %s28, 2
        // Predicated region
        $region105: #{tpu_custom_call.1} parent=103 // pred_check
          %p1399 = pneg %p361
        $region106: #{tpu_custom_call.1} parent=103 // pred_check_branch
          %1401 = sbr.rel (%p1399) target = $region108
        $region107: #{tpu_custom_call.1} parent=103 // pred_region
          %s1402 = sand.u32 %s346, 1
          %s1403 = scalar_lea.sflag [#allocation5], %s1402
          %s1404 = sand.u32 %s346, 1
          %s1405 = smul.addr %s1404, 8
          %s1406 = scalar_lea.vmem [#allocation12], %s1405
          %1407 = dma.done %s1403, 128
        $region108: #{tpu_custom_call.1} parent=103 // pred_fallthru
          _
      $region104: #{tpu_custom_call.1} parent=5 // pred_fallthru
        _
    $region6: #{tpu_custom_call.1} parent=1 // loop_footer
      %s32 = sadd.s32 1, %s28
    $region7: #{tpu_custom_call.1} parent=1 // loop_footer_branch
      %27 = sbr.rel target = $region3
    $region8: #{tpu_custom_call.1} parent=1 // loop_exit
      _
    %1408 = vsyncpa [#allocation4], 1
    %s1409 = scalar_lea.sflag [#allocation4], 1
    %1410 = vsyncpa %s1409, 1
    %1411 = vsyncpa [#allocation7], 1
    %1412 = vsyncpa [#allocation10], 1
    %1413 = vsyncpa [#allocation5], 1
    %s1414 = scalar_lea.sflag [#allocation5], 1
    %1415 = vsyncpa %s1414, 1

</llo_original>
